<compile_context>
chip_gen: v7x
topology: tpu7x:2x2x1
jax: 0.10.0
libtpu: 0.0.40
codegen_flags: <defaults>
</compile_context>

<pallas_src>
import jax
import jax.numpy as jnp
from jax import lax
from jax.experimental import pallas as pl
from jax.experimental.pallas import tpu as pltpu


# --------------------------------------------------------------------------
# Fused kernel: all GRU layers + statically unrolled time loop + final Linear.
# Ref order: x2d, [w_ih, w_hh, b_gi, b_hn] * L, fc_w, fc_b, out
# --------------------------------------------------------------------------
def make_gru_model_kernel(num_layers, T, B, H):
    n_in = 1 + 4 * num_layers + 2

    def kernel(*refs):
        x_ref = refs[0]
        layer_refs = refs[1:1 + 4 * num_layers]
        fc_w_ref = refs[1 + 4 * num_layers]
        fc_b_ref = refs[2 + 4 * num_layers]
        out_ref = refs[n_in]

        xin = x_ref[...]                        # (T*B, in0) f32, time-major rows
        h = None

        for l in range(num_layers):
            w_ih = layer_refs[4 * l][...]       # (in_l, 3H) bf16, gates packed [r|z|n]
            w_hh = layer_refs[4 * l + 1][...]   # (H, 3H)    bf16
            b_gi = layer_refs[4 * l + 2][...]   # (1, 3H)    f32: b_ih + [b_hh_r|b_hh_z|0]
            b_hn = layer_refs[4 * l + 3][...]   # (1, H)     f32: b_hh_n
            b_hn_b = jnp.broadcast_to(b_hn, (B, H))   # hoisted: no per-step broadcast

            # Whole-sequence input projection: one bf16 MXU matmul per layer,
            # f32 accumulation, OFF the serial dependency chain.
            gi_all = jnp.dot(xin.astype(jnp.bfloat16), w_ih,
                             preferred_element_type=jnp.float32) + b_gi   # (T*B, 3H) f32

            is_last = (l == num_layers - 1)
            h = jnp.zeros((B, H), jnp.float32)
            hs = []

            # Statically unrolled recurrence: only h @ W_hh is serial.
            for t in range(T):
                gi_t = gi_all[t * B:(t + 1) * B, :]            # static, sublane-aligned slice
                gh = jnp.dot(h.astype(jnp.bfloat16), w_hh,
                             preferred_element_type=jnp.float32)           # (B, 3H) f32
                s = gi_t + gh                                  # one full-tile VPU add
                rz = jax.nn.sigmoid(s[:, :2 * H])              # fused r/z: single EUP push
                r = rz[:, :H]
                z = rz[:, H:]
                n = jnp.tanh(gi_t[:, 2 * H:] + r * (gh[:, 2 * H:] + b_hn_b))
                h = n + z * (h - n)                            # == (1-z)*n + z*h_prev
                if not is_last:
                    hs.append(h)

            if not is_last:
                xin = jnp.concatenate(hs, axis=0)              # (T*B, H) next layer input

        # Fused final Linear on the last-timestep hidden state.
        out_ref[...] = (jnp.dot(h.astype(jnp.bfloat16), fc_w_ref[...],
                                preferred_element_type=jnp.float32)
                        + fc_b_ref[...])

    return kernel


# --------------------------------------------------------------------------
# Wrapper: PyTorch batch_first layout in, (B, output_size) out.
# --------------------------------------------------------------------------
def gru_model_forward(x_bti, packed_params):
    """x_bti: (B, T, input_size) f32. Returns (B, output_size) f32."""
    B, T, I = x_bti.shape
    layers = packed_params["layers"]
    L = len(layers)
    H = layers[0][1].shape[0]                      # w_hh: (H, 3H)
    O = packed_params["fc_w"].shape[-1]

    # Time-major, pre-flattened to (T*B, I): no in-kernel 3D reshapes.
    x2d = jnp.transpose(x_bti, (1, 0, 2)).reshape(T * B, I).astype(jnp.float32)

    inputs = [x2d]
    for (w_ih, w_hh, b_gi, b_hn) in layers:
        inputs += [w_ih, w_hh, b_gi, b_hn]
    inputs += [packed_params["fc_w"], packed_params["fc_b"]]

    kernel = make_gru_model_kernel(L, T, B, H)

    return pl.pallas_call(
        kernel,
        out_shape=jax.ShapeDtypeStruct((B, O), jnp.float32),
        compiler_params=pltpu.CompilerParams(
            vmem_limit_bytes=32 * 1024 * 1024),    # fits every generation incl. v7x
    )(*inputs)


# --------------------------------------------------------------------------
# Parameter init (PyTorch-style uniform(-1/sqrt(H), 1/sqrt(H))) in "raw" form.
# raw per layer: w_ih (in, 3H), w_hh (H, 3H), b_ih (1, 3H), b_hh (1, 3H);
# gate order [r | z | n] along the 3H axis (matches PyTorch).
# --------------------------------------------------------------------------
def init_params(key, input_size, hidden_size, num_layers, output_size):
    bound = 1.0 / (hidden_size ** 0.5)
    layers = []
    in_sz = input_size
    for _ in range(num_layers):
        key, k1, k2, k3, k4 = jax.random.split(key, 5)
        w_ih = jax.random.uniform(k1, (in_sz, 3 * hidden_size), jnp.float32, -bound, bound)
        w_hh = jax.random.uniform(k2, (hidden_size, 3 * hidden_size), jnp.float32, -bound, bound)
        b_ih = jax.random.uniform(k3, (1, 3 * hidden_size), jnp.float32, -bound, bound)
        b_hh = jax.random.uniform(k4, (1, 3 * hidden_size), jnp.float32, -bound, bound)
        layers.append((w_ih, w_hh, b_ih, b_hh))
        in_sz = hidden_size
    key, k5, k6 = jax.random.split(key, 3)
    fc_w = jax.random.uniform(k5, (hidden_size, output_size), jnp.float32, -bound, bound)
    fc_b = jax.random.uniform(k6, (1, output_size), jnp.float32, -bound, bound)
    return {"layers": layers, "fc_w": fc_w, "fc_b": fc_b}


def pack_params(raw):
    """Fold biases and cast MXU weights to bf16.

    Sigmoid gates (r, z) are bias-additive, so b_hh_{r,z} folds into the
    precomputed input-projection bias; b_hh_n must stay inside the r*(.) term.
    Weights go to bf16 (MXU operands); biases stay f32 (added post-accumulate).
    """
    H = raw["layers"][0][1].shape[0]
    layers = []
    for (w_ih, w_hh, b_ih, b_hh) in raw["layers"]:
        b_gi = b_ih + jnp.concatenate(
            [b_hh[:, :2 * H], jnp.zeros((1, H), jnp.float32)], axis=-1)
        b_hn = b_hh[:, 2 * H:]
        layers.append((w_ih.astype(jnp.bfloat16), w_hh.astype(jnp.bfloat16), b_gi, b_hn))
    return {"layers": layers,
            "fc_w": raw["fc_w"].astype(jnp.bfloat16),
            "fc_b": raw["fc_b"]}


# --------------------------------------------------------------------------
# Pure-JAX reference implementing the PyTorch GRU + Linear semantics.
# mm_dtype=jnp.bfloat16 mirrors the kernel's MXU precision (logic check);
# mm_dtype=jnp.float32 is the exact-f32 semantic reference (drift check).
# --------------------------------------------------------------------------
def gru_model_ref(x_bti, raw_params, mm_dtype=jnp.float32):
    prec = jax.lax.Precision.HIGHEST if mm_dtype == jnp.float32 else None
    x = jnp.transpose(x_bti, (1, 0, 2)).astype(jnp.float32)
    B = x.shape[1]
    for (w_ih, w_hh, b_ih, b_hh) in raw_params["layers"]:
        H = w_hh.shape[0]
        w_ih_c = w_ih.astype(mm_dtype)
        w_hh_c = w_hh.astype(mm_dtype)

        def step(h, x_t, w_ih_c=w_ih_c, w_hh_c=w_hh_c, b_ih=b_ih, b_hh=b_hh, H=H):
            gi = jnp.dot(x_t.astype(mm_dtype), w_ih_c,
                         preferred_element_type=jnp.float32, precision=prec) + b_ih
            gh = jnp.dot(h.astype(mm_dtype), w_hh_c,
                         preferred_element_type=jnp.float32, precision=prec) + b_hh
            r = jax.nn.sigmoid(gi[:, :H] + gh[:, :H])
            z = jax.nn.sigmoid(gi[:, H:2 * H] + gh[:, H:2 * H])
            n = jnp.tanh(gi[:, 2 * H:] + r * gh[:, 2 * H:])
            h_new = (1.0 - z) * n + z * h
            return h_new, h_new

        _, x = lax.scan(step, jnp.zeros((B, H), jnp.float32), x)
    return (jnp.dot(x[-1].astype(mm_dtype), raw_params["fc_w"].astype(mm_dtype),
                    preferred_element_type=jnp.float32, precision=prec)
            + raw_params["fc_b"])


if __name__ == "__main__":
    # x: (batch, seq, input_size), like the PyTorch module's forward.
    B, T, I, H, L, O = 8, 8, 16, 32, 2, 8

    key = jax.random.PRNGKey(0)
    key, kx = jax.random.split(key)
    x = jax.random.normal(kx, (B, T, I), jnp.float32)

    raw_params = init_params(key, input_size=I, hidden_size=H,
                             num_layers=L, output_size=O)
    packed_params = pack_params(raw_params)

    out = jax.block_until_ready(gru_model_forward(x, packed_params))
    assert out.shape == (B, O)

    # 1) Logic check against a reference that mirrors the kernel's matmul
    #    precision (bf16 MXU operands, f32 accumulation): tight tolerance.
    ref_mirror = jax.block_until_ready(gru_model_ref(x, raw_params, mm_dtype=jnp.bfloat16))
    err_mirror = float(jnp.max(jnp.abs(out - ref_mirror)))
    assert jnp.allclose(out, ref_mirror, atol=1e-4, rtol=1e-4), \
        f"kernel logic mismatch: max abs err {err_mirror}"

    # 2) Numerical drift vs the exact f32 GRU semantics stays small
    #    (bounded by the bf16 MXU-operand rounding at K=16/32).
    ref_f32 = jax.block_until_ready(gru_model_ref(x, raw_params, mm_dtype=jnp.float32))
    err_f32 = float(jnp.max(jnp.abs(out - ref_f32)))
    assert err_f32 < 1e-2, f"bf16 MXU drift too large vs f32 reference: {err_f32}"

    print("KERNEL_OK")
</pallas_src>

<mosaic_0001>
module attributes {stable_mosaic.version = 11 : i64} {
  func.func @kernel(%arg0: memref<64x16xf32, #tpu.memory_space<vmem>>, %arg1: memref<16x96xbf16, #tpu.memory_space<vmem>>, %arg2: memref<32x96xbf16, #tpu.memory_space<vmem>>, %arg3: memref<1x96xf32, #tpu.memory_space<vmem>>, %arg4: memref<1x32xf32, #tpu.memory_space<vmem>>, %arg5: memref<32x96xbf16, #tpu.memory_space<vmem>>, %arg6: memref<32x96xbf16, #tpu.memory_space<vmem>>, %arg7: memref<1x96xf32, #tpu.memory_space<vmem>>, %arg8: memref<1x32xf32, #tpu.memory_space<vmem>>, %arg9: memref<32x8xbf16, #tpu.memory_space<vmem>>, %arg10: memref<1x8xf32, #tpu.memory_space<vmem>>, %arg11: memref<8x8xf32, #tpu.memory_space<vmem>>) attributes {dimension_semantics = [], scalar_prefetch = 0 : i64, scratch_operands = 0 : i64, tpu.core_type = #tpu.core_type<tc>} {
    %c0 = arith.constant 0 : index
    %c0_0 = arith.constant 0 : index
    %0 = vector.load %arg0[%c0, %c0_0] : memref<64x16xf32, #tpu.memory_space<vmem>>, vector<64x16xf32>
    %c0_1 = arith.constant 0 : index
    %c0_2 = arith.constant 0 : index
    %1 = vector.load %arg1[%c0_1, %c0_2] : memref<16x96xbf16, #tpu.memory_space<vmem>>, vector<16x96xbf16>
    %c0_3 = arith.constant 0 : index
    %c0_4 = arith.constant 0 : index
    %2 = vector.load %arg2[%c0_3, %c0_4] : memref<32x96xbf16, #tpu.memory_space<vmem>>, vector<32x96xbf16>
    %c0_5 = arith.constant 0 : index
    %c0_6 = arith.constant 0 : index
    %3 = vector.load %arg3[%c0_5, %c0_6] : memref<1x96xf32, #tpu.memory_space<vmem>>, vector<1x96xf32>
    %c0_7 = arith.constant 0 : index
    %c0_8 = arith.constant 0 : index
    %4 = vector.load %arg4[%c0_7, %c0_8] : memref<1x32xf32, #tpu.memory_space<vmem>>, vector<1x32xf32>
    %5 = vector.shape_cast %4 : vector<1x32xf32> to vector<1x32xf32>
    %6 = vector.broadcast %5 : vector<1x32xf32> to vector<8x32xf32>
    %7 = arith.truncf %0 : vector<64x16xf32> to vector<64x16xbf16>
    %cst = arith.constant dense<0.000000e+00> : vector<64x96xf32>
    %8 = tpu.matmul %7, %1, %cst {dimension_numbers = #tpu.dot_dimension_numbers<[1], [0], [0], [1], [0, 0, 1, 1], [], []>} : vector<64x16xbf16>, vector<16x96xbf16>, vector<64x96xf32> -> vector<64x96xf32>
    %9 = vector.broadcast %3 : vector<1x96xf32> to vector<64x96xf32>
    %10 = arith.addf %8, %9 : vector<64x96xf32>
    %cst_9 = arith.constant 0.000000e+00 : f32
    %11 = vector.broadcast %cst_9 : f32 to vector<8x32xf32>
    %12 = vector.extract_strided_slice %10 {offsets = [0, 0], sizes = [8, 96], strides = [1, 1]} : vector<64x96xf32> to vector<8x96xf32>
    %13 = arith.truncf %11 : vector<8x32xf32> to vector<8x32xbf16>
    %cst_10 = arith.constant dense<0.000000e+00> : vector<8x96xf32>
    %14 = tpu.matmul %13, %2, %cst_10 {dimension_numbers = #tpu.dot_dimension_numbers<[1], [0], [0], [1], [0, 0, 1, 1], [], []>} : vector<8x32xbf16>, vector<32x96xbf16>, vector<8x96xf32> -> vector<8x96xf32>
    %15 = arith.addf %12, %14 : vector<8x96xf32>
    %16 = vector.extract_strided_slice %15 {offsets = [0, 0], sizes = [8, 64], strides = [1, 1]} : vector<8x96xf32> to vector<8x64xf32>
    %17 = arith.negf %16 : vector<8x64xf32>
    %18 = math.exp %17 : vector<8x64xf32>
    %cst_11 = arith.constant 1.000000e+00 : f32
    %19 = vector.broadcast %cst_11 : f32 to vector<8x64xf32>
    %20 = arith.addf %19, %18 : vector<8x64xf32>
    %21 = arith.divf %19, %20 : vector<8x64xf32>
    %22 = vector.extract_strided_slice %21 {offsets = [0, 0], sizes = [8, 32], strides = [1, 1]} : vector<8x64xf32> to vector<8x32xf32>
    %23 = vector.extract_strided_slice %21 {offsets = [0, 32], sizes = [8, 32], strides = [1, 1]} : vector<8x64xf32> to vector<8x32xf32>
    %24 = vector.extract_strided_slice %12 {offsets = [0, 64], sizes = [8, 32], strides = [1, 1]} : vector<8x96xf32> to vector<8x32xf32>
    %25 = vector.extract_strided_slice %14 {offsets = [0, 64], sizes = [8, 32], strides = [1, 1]} : vector<8x96xf32> to vector<8x32xf32>
    %26 = arith.addf %25, %6 : vector<8x32xf32>
    %27 = arith.mulf %22, %26 : vector<8x32xf32>
    %28 = arith.addf %24, %27 : vector<8x32xf32>
    %29 = math.tanh %28 : vector<8x32xf32>
    %30 = arith.subf %11, %29 : vector<8x32xf32>
    %31 = arith.mulf %23, %30 : vector<8x32xf32>
    %32 = arith.addf %29, %31 : vector<8x32xf32>
    %33 = vector.extract_strided_slice %10 {offsets = [8, 0], sizes = [8, 96], strides = [1, 1]} : vector<64x96xf32> to vector<8x96xf32>
    %34 = arith.truncf %32 : vector<8x32xf32> to vector<8x32xbf16>
    %cst_12 = arith.constant dense<0.000000e+00> : vector<8x96xf32>
    %35 = tpu.matmul %34, %2, %cst_12 {dimension_numbers = #tpu.dot_dimension_numbers<[1], [0], [0], [1], [0, 0, 1, 1], [], []>} : vector<8x32xbf16>, vector<32x96xbf16>, vector<8x96xf32> -> vector<8x96xf32>
    %36 = arith.addf %33, %35 : vector<8x96xf32>
    %37 = vector.extract_strided_slice %36 {offsets = [0, 0], sizes = [8, 64], strides = [1, 1]} : vector<8x96xf32> to vector<8x64xf32>
    %38 = arith.negf %37 : vector<8x64xf32>
    %39 = math.exp %38 : vector<8x64xf32>
    %cst_13 = arith.constant 1.000000e+00 : f32
    %40 = vector.broadcast %cst_13 : f32 to vector<8x64xf32>
    %41 = arith.addf %40, %39 : vector<8x64xf32>
    %42 = arith.divf %40, %41 : vector<8x64xf32>
    %43 = vector.extract_strided_slice %42 {offsets = [0, 0], sizes = [8, 32], strides = [1, 1]} : vector<8x64xf32> to vector<8x32xf32>
    %44 = vector.extract_strided_slice %42 {offsets = [0, 32], sizes = [8, 32], strides = [1, 1]} : vector<8x64xf32> to vector<8x32xf32>
    %45 = vector.extract_strided_slice %33 {offsets = [0, 64], sizes = [8, 32], strides = [1, 1]} : vector<8x96xf32> to vector<8x32xf32>
    %46 = vector.extract_strided_slice %35 {offsets = [0, 64], sizes = [8, 32], strides = [1, 1]} : vector<8x96xf32> to vector<8x32xf32>
    %47 = arith.addf %46, %6 : vector<8x32xf32>
    %48 = arith.mulf %43, %47 : vector<8x32xf32>
    %49 = arith.addf %45, %48 : vector<8x32xf32>
    %50 = math.tanh %49 : vector<8x32xf32>
    %51 = arith.subf %32, %50 : vector<8x32xf32>
    %52 = arith.mulf %44, %51 : vector<8x32xf32>
    %53 = arith.addf %50, %52 : vector<8x32xf32>
    %54 = vector.extract_strided_slice %10 {offsets = [16, 0], sizes = [8, 96], strides = [1, 1]} : vector<64x96xf32> to vector<8x96xf32>
    %55 = arith.truncf %53 : vector<8x32xf32> to vector<8x32xbf16>
    %cst_14 = arith.constant dense<0.000000e+00> : vector<8x96xf32>
    %56 = tpu.matmul %55, %2, %cst_14 {dimension_numbers = #tpu.dot_dimension_numbers<[1], [0], [0], [1], [0, 0, 1, 1], [], []>} : vector<8x32xbf16>, vector<32x96xbf16>, vector<8x96xf32> -> vector<8x96xf32>
    %57 = arith.addf %54, %56 : vector<8x96xf32>
    %58 = vector.extract_strided_slice %57 {offsets = [0, 0], sizes = [8, 64], strides = [1, 1]} : vector<8x96xf32> to vector<8x64xf32>
    %59 = arith.negf %58 : vector<8x64xf32>
    %60 = math.exp %59 : vector<8x64xf32>
    %cst_15 = arith.constant 1.000000e+00 : f32
    %61 = vector.broadcast %cst_15 : f32 to vector<8x64xf32>
    %62 = arith.addf %61, %60 : vector<8x64xf32>
    %63 = arith.divf %61, %62 : vector<8x64xf32>
    %64 = vector.extract_strided_slice %63 {offsets = [0, 0], sizes = [8, 32], strides = [1, 1]} : vector<8x64xf32> to vector<8x32xf32>
    %65 = vector.extract_strided_slice %63 {offsets = [0, 32], sizes = [8, 32], strides = [1, 1]} : vector<8x64xf32> to vector<8x32xf32>
    %66 = vector.extract_strided_slice %54 {offsets = [0, 64], sizes = [8, 32], strides = [1, 1]} : vector<8x96xf32> to vector<8x32xf32>
    %67 = vector.extract_strided_slice %56 {offsets = [0, 64], sizes = [8, 32], strides = [1, 1]} : vector<8x96xf32> to vector<8x32xf32>
    %68 = arith.addf %67, %6 : vector<8x32xf32>
    %69 = arith.mulf %64, %68 : vector<8x32xf32>
    %70 = arith.addf %66, %69 : vector<8x32xf32>
    %71 = math.tanh %70 : vector<8x32xf32>
    %72 = arith.subf %53, %71 : vector<8x32xf32>
    %73 = arith.mulf %65, %72 : vector<8x32xf32>
    %74 = arith.addf %71, %73 : vector<8x32xf32>
    %75 = vector.extract_strided_slice %10 {offsets = [24, 0], sizes = [8, 96], strides = [1, 1]} : vector<64x96xf32> to vector<8x96xf32>
    %76 = arith.truncf %74 : vector<8x32xf32> to vector<8x32xbf16>
    %cst_16 = arith.constant dense<0.000000e+00> : vector<8x96xf32>
    %77 = tpu.matmul %76, %2, %cst_16 {dimension_numbers = #tpu.dot_dimension_numbers<[1], [0], [0], [1], [0, 0, 1, 1], [], []>} : vector<8x32xbf16>, vector<32x96xbf16>, vector<8x96xf32> -> vector<8x96xf32>
    %78 = arith.addf %75, %77 : vector<8x96xf32>
    %79 = vector.extract_strided_slice %78 {offsets = [0, 0], sizes = [8, 64], strides = [1, 1]} : vector<8x96xf32> to vector<8x64xf32>
    %80 = arith.negf %79 : vector<8x64xf32>
    %81 = math.exp %80 : vector<8x64xf32>
    %cst_17 = arith.constant 1.000000e+00 : f32
    %82 = vector.broadcast %cst_17 : f32 to vector<8x64xf32>
    %83 = arith.addf %82, %81 : vector<8x64xf32>
    %84 = arith.divf %82, %83 : vector<8x64xf32>
    %85 = vector.extract_strided_slice %84 {offsets = [0, 0], sizes = [8, 32], strides = [1, 1]} : vector<8x64xf32> to vector<8x32xf32>
    %86 = vector.extract_strided_slice %84 {offsets = [0, 32], sizes = [8, 32], strides = [1, 1]} : vector<8x64xf32> to vector<8x32xf32>
    %87 = vector.extract_strided_slice %75 {offsets = [0, 64], sizes = [8, 32], strides = [1, 1]} : vector<8x96xf32> to vector<8x32xf32>
    %88 = vector.extract_strided_slice %77 {offsets = [0, 64], sizes = [8, 32], strides = [1, 1]} : vector<8x96xf32> to vector<8x32xf32>
    %89 = arith.addf %88, %6 : vector<8x32xf32>
    %90 = arith.mulf %85, %89 : vector<8x32xf32>
    %91 = arith.addf %87, %90 : vector<8x32xf32>
    %92 = math.tanh %91 : vector<8x32xf32>
    %93 = arith.subf %74, %92 : vector<8x32xf32>
    %94 = arith.mulf %86, %93 : vector<8x32xf32>
    %95 = arith.addf %92, %94 : vector<8x32xf32>
    %96 = vector.extract_strided_slice %10 {offsets = [32, 0], sizes = [8, 96], strides = [1, 1]} : vector<64x96xf32> to vector<8x96xf32>
    %97 = arith.truncf %95 : vector<8x32xf32> to vector<8x32xbf16>
    %cst_18 = arith.constant dense<0.000000e+00> : vector<8x96xf32>
    %98 = tpu.matmul %97, %2, %cst_18 {dimension_numbers = #tpu.dot_dimension_numbers<[1], [0], [0], [1], [0, 0, 1, 1], [], []>} : vector<8x32xbf16>, vector<32x96xbf16>, vector<8x96xf32> -> vector<8x96xf32>
    %99 = arith.addf %96, %98 : vector<8x96xf32>
    %100 = vector.extract_strided_slice %99 {offsets = [0, 0], sizes = [8, 64], strides = [1, 1]} : vector<8x96xf32> to vector<8x64xf32>
    %101 = arith.negf %100 : vector<8x64xf32>
    %102 = math.exp %101 : vector<8x64xf32>
    %cst_19 = arith.constant 1.000000e+00 : f32
    %103 = vector.broadcast %cst_19 : f32 to vector<8x64xf32>
    %104 = arith.addf %103, %102 : vector<8x64xf32>
    %105 = arith.divf %103, %104 : vector<8x64xf32>
    %106 = vector.extract_strided_slice %105 {offsets = [0, 0], sizes = [8, 32], strides = [1, 1]} : vector<8x64xf32> to vector<8x32xf32>
    %107 = vector.extract_strided_slice %105 {offsets = [0, 32], sizes = [8, 32], strides = [1, 1]} : vector<8x64xf32> to vector<8x32xf32>
    %108 = vector.extract_strided_slice %96 {offsets = [0, 64], sizes = [8, 32], strides = [1, 1]} : vector<8x96xf32> to vector<8x32xf32>
    %109 = vector.extract_strided_slice %98 {offsets = [0, 64], sizes = [8, 32], strides = [1, 1]} : vector<8x96xf32> to vector<8x32xf32>
    %110 = arith.addf %109, %6 : vector<8x32xf32>
    %111 = arith.mulf %106, %110 : vector<8x32xf32>
    %112 = arith.addf %108, %111 : vector<8x32xf32>
    %113 = math.tanh %112 : vector<8x32xf32>
    %114 = arith.subf %95, %113 : vector<8x32xf32>
    %115 = arith.mulf %107, %114 : vector<8x32xf32>
    %116 = arith.addf %113, %115 : vector<8x32xf32>
    %117 = vector.extract_strided_slice %10 {offsets = [40, 0], sizes = [8, 96], strides = [1, 1]} : vector<64x96xf32> to vector<8x96xf32>
    %118 = arith.truncf %116 : vector<8x32xf32> to vector<8x32xbf16>
    %cst_20 = arith.constant dense<0.000000e+00> : vector<8x96xf32>
    %119 = tpu.matmul %118, %2, %cst_20 {dimension_numbers = #tpu.dot_dimension_numbers<[1], [0], [0], [1], [0, 0, 1, 1], [], []>} : vector<8x32xbf16>, vector<32x96xbf16>, vector<8x96xf32> -> vector<8x96xf32>
    %120 = arith.addf %117, %119 : vector<8x96xf32>
    %121 = vector.extract_strided_slice %120 {offsets = [0, 0], sizes = [8, 64], strides = [1, 1]} : vector<8x96xf32> to vector<8x64xf32>
    %122 = arith.negf %121 : vector<8x64xf32>
    %123 = math.exp %122 : vector<8x64xf32>
    %cst_21 = arith.constant 1.000000e+00 : f32
    %124 = vector.broadcast %cst_21 : f32 to vector<8x64xf32>
    %125 = arith.addf %124, %123 : vector<8x64xf32>
    %126 = arith.divf %124, %125 : vector<8x64xf32>
    %127 = vector.extract_strided_slice %126 {offsets = [0, 0], sizes = [8, 32], strides = [1, 1]} : vector<8x64xf32> to vector<8x32xf32>
    %128 = vector.extract_strided_slice %126 {offsets = [0, 32], sizes = [8, 32], strides = [1, 1]} : vector<8x64xf32> to vector<8x32xf32>
    %129 = vector.extract_strided_slice %117 {offsets = [0, 64], sizes = [8, 32], strides = [1, 1]} : vector<8x96xf32> to vector<8x32xf32>
    %130 = vector.extract_strided_slice %119 {offsets = [0, 64], sizes = [8, 32], strides = [1, 1]} : vector<8x96xf32> to vector<8x32xf32>
    %131 = arith.addf %130, %6 : vector<8x32xf32>
    %132 = arith.mulf %127, %131 : vector<8x32xf32>
    %133 = arith.addf %129, %132 : vector<8x32xf32>
    %134 = math.tanh %133 : vector<8x32xf32>
    %135 = arith.subf %116, %134 : vector<8x32xf32>
    %136 = arith.mulf %128, %135 : vector<8x32xf32>
    %137 = arith.addf %134, %136 : vector<8x32xf32>
    %138 = vector.extract_strided_slice %10 {offsets = [48, 0], sizes = [8, 96], strides = [1, 1]} : vector<64x96xf32> to vector<8x96xf32>
    %139 = arith.truncf %137 : vector<8x32xf32> to vector<8x32xbf16>
    %cst_22 = arith.constant dense<0.000000e+00> : vector<8x96xf32>
    %140 = tpu.matmul %139, %2, %cst_22 {dimension_numbers = #tpu.dot_dimension_numbers<[1], [0], [0], [1], [0, 0, 1, 1], [], []>} : vector<8x32xbf16>, vector<32x96xbf16>, vector<8x96xf32> -> vector<8x96xf32>
    %141 = arith.addf %138, %140 : vector<8x96xf32>
    %142 = vector.extract_strided_slice %141 {offsets = [0, 0], sizes = [8, 64], strides = [1, 1]} : vector<8x96xf32> to vector<8x64xf32>
    %143 = arith.negf %142 : vector<8x64xf32>
    %144 = math.exp %143 : vector<8x64xf32>
    %cst_23 = arith.constant 1.000000e+00 : f32
    %145 = vector.broadcast %cst_23 : f32 to vector<8x64xf32>
    %146 = arith.addf %145, %144 : vector<8x64xf32>
    %147 = arith.divf %145, %146 : vector<8x64xf32>
    %148 = vector.extract_strided_slice %147 {offsets = [0, 0], sizes = [8, 32], strides = [1, 1]} : vector<8x64xf32> to vector<8x32xf32>
    %149 = vector.extract_strided_slice %147 {offsets = [0, 32], sizes = [8, 32], strides = [1, 1]} : vector<8x64xf32> to vector<8x32xf32>
    %150 = vector.extract_strided_slice %138 {offsets = [0, 64], sizes = [8, 32], strides = [1, 1]} : vector<8x96xf32> to vector<8x32xf32>
    %151 = vector.extract_strided_slice %140 {offsets = [0, 64], sizes = [8, 32], strides = [1, 1]} : vector<8x96xf32> to vector<8x32xf32>
    %152 = arith.addf %151, %6 : vector<8x32xf32>
    %153 = arith.mulf %148, %152 : vector<8x32xf32>
    %154 = arith.addf %150, %153 : vector<8x32xf32>
    %155 = math.tanh %154 : vector<8x32xf32>
    %156 = arith.subf %137, %155 : vector<8x32xf32>
    %157 = arith.mulf %149, %156 : vector<8x32xf32>
    %158 = arith.addf %155, %157 : vector<8x32xf32>
    %159 = vector.extract_strided_slice %10 {offsets = [56, 0], sizes = [8, 96], strides = [1, 1]} : vector<64x96xf32> to vector<8x96xf32>
    %160 = arith.truncf %158 : vector<8x32xf32> to vector<8x32xbf16>
    %cst_24 = arith.constant dense<0.000000e+00> : vector<8x96xf32>
    %161 = tpu.matmul %160, %2, %cst_24 {dimension_numbers = #tpu.dot_dimension_numbers<[1], [0], [0], [1], [0, 0, 1, 1], [], []>} : vector<8x32xbf16>, vector<32x96xbf16>, vector<8x96xf32> -> vector<8x96xf32>
    %162 = arith.addf %159, %161 : vector<8x96xf32>
    %163 = vector.extract_strided_slice %162 {offsets = [0, 0], sizes = [8, 64], strides = [1, 1]} : vector<8x96xf32> to vector<8x64xf32>
    %164 = arith.negf %163 : vector<8x64xf32>
    %165 = math.exp %164 : vector<8x64xf32>
    %cst_25 = arith.constant 1.000000e+00 : f32
    %166 = vector.broadcast %cst_25 : f32 to vector<8x64xf32>
    %167 = arith.addf %166, %165 : vector<8x64xf32>
    %168 = arith.divf %166, %167 : vector<8x64xf32>
    %169 = vector.extract_strided_slice %168 {offsets = [0, 0], sizes = [8, 32], strides = [1, 1]} : vector<8x64xf32> to vector<8x32xf32>
    %170 = vector.extract_strided_slice %168 {offsets = [0, 32], sizes = [8, 32], strides = [1, 1]} : vector<8x64xf32> to vector<8x32xf32>
    %171 = vector.extract_strided_slice %159 {offsets = [0, 64], sizes = [8, 32], strides = [1, 1]} : vector<8x96xf32> to vector<8x32xf32>
    %172 = vector.extract_strided_slice %161 {offsets = [0, 64], sizes = [8, 32], strides = [1, 1]} : vector<8x96xf32> to vector<8x32xf32>
    %173 = arith.addf %172, %6 : vector<8x32xf32>
    %174 = arith.mulf %169, %173 : vector<8x32xf32>
    %175 = arith.addf %171, %174 : vector<8x32xf32>
    %176 = math.tanh %175 : vector<8x32xf32>
    %177 = arith.subf %158, %176 : vector<8x32xf32>
    %178 = arith.mulf %170, %177 : vector<8x32xf32>
    %179 = arith.addf %176, %178 : vector<8x32xf32>
    %180 = tpu.concatenate %32, %53, %74, %95, %116, %137, %158, %179 in 0 : vector<8x32xf32>, vector<8x32xf32>, vector<8x32xf32>, vector<8x32xf32>, vector<8x32xf32>, vector<8x32xf32>, vector<8x32xf32>, vector<8x32xf32> -> vector<64x32xf32>
    %c0_26 = arith.constant 0 : index
    %c0_27 = arith.constant 0 : index
    %181 = vector.load %arg5[%c0_26, %c0_27] : memref<32x96xbf16, #tpu.memory_space<vmem>>, vector<32x96xbf16>
    %c0_28 = arith.constant 0 : index
    %c0_29 = arith.constant 0 : index
    %182 = vector.load %arg6[%c0_28, %c0_29] : memref<32x96xbf16, #tpu.memory_space<vmem>>, vector<32x96xbf16>
    %c0_30 = arith.constant 0 : index
    %c0_31 = arith.constant 0 : index
    %183 = vector.load %arg7[%c0_30, %c0_31] : memref<1x96xf32, #tpu.memory_space<vmem>>, vector<1x96xf32>
    %c0_32 = arith.constant 0 : index
    %c0_33 = arith.constant 0 : index
    %184 = vector.load %arg8[%c0_32, %c0_33] : memref<1x32xf32, #tpu.memory_space<vmem>>, vector<1x32xf32>
    %185 = vector.shape_cast %184 : vector<1x32xf32> to vector<1x32xf32>
    %186 = vector.broadcast %185 : vector<1x32xf32> to vector<8x32xf32>
    %187 = arith.truncf %180 : vector<64x32xf32> to vector<64x32xbf16>
    %cst_34 = arith.constant dense<0.000000e+00> : vector<64x96xf32>
    %188 = tpu.matmul %187, %181, %cst_34 {dimension_numbers = #tpu.dot_dimension_numbers<[1], [0], [0], [1], [0, 0, 1, 1], [], []>} : vector<64x32xbf16>, vector<32x96xbf16>, vector<64x96xf32> -> vector<64x96xf32>
    %189 = vector.broadcast %183 : vector<1x96xf32> to vector<64x96xf32>
    %190 = arith.addf %188, %189 : vector<64x96xf32>
    %cst_35 = arith.constant 0.000000e+00 : f32
    %191 = vector.broadcast %cst_35 : f32 to vector<8x32xf32>
    %192 = vector.extract_strided_slice %190 {offsets = [0, 0], sizes = [8, 96], strides = [1, 1]} : vector<64x96xf32> to vector<8x96xf32>
    %193 = arith.truncf %191 : vector<8x32xf32> to vector<8x32xbf16>
    %cst_36 = arith.constant dense<0.000000e+00> : vector<8x96xf32>
    %194 = tpu.matmul %193, %182, %cst_36 {dimension_numbers = #tpu.dot_dimension_numbers<[1], [0], [0], [1], [0, 0, 1, 1], [], []>} : vector<8x32xbf16>, vector<32x96xbf16>, vector<8x96xf32> -> vector<8x96xf32>
    %195 = arith.addf %192, %194 : vector<8x96xf32>
    %196 = vector.extract_strided_slice %195 {offsets = [0, 0], sizes = [8, 64], strides = [1, 1]} : vector<8x96xf32> to vector<8x64xf32>
    %197 = arith.negf %196 : vector<8x64xf32>
    %198 = math.exp %197 : vector<8x64xf32>
    %cst_37 = arith.constant 1.000000e+00 : f32
    %199 = vector.broadcast %cst_37 : f32 to vector<8x64xf32>
    %200 = arith.addf %199, %198 : vector<8x64xf32>
    %201 = arith.divf %199, %200 : vector<8x64xf32>
    %202 = vector.extract_strided_slice %201 {offsets = [0, 0], sizes = [8, 32], strides = [1, 1]} : vector<8x64xf32> to vector<8x32xf32>
    %203 = vector.extract_strided_slice %201 {offsets = [0, 32], sizes = [8, 32], strides = [1, 1]} : vector<8x64xf32> to vector<8x32xf32>
    %204 = vector.extract_strided_slice %192 {offsets = [0, 64], sizes = [8, 32], strides = [1, 1]} : vector<8x96xf32> to vector<8x32xf32>
    %205 = vector.extract_strided_slice %194 {offsets = [0, 64], sizes = [8, 32], strides = [1, 1]} : vector<8x96xf32> to vector<8x32xf32>
    %206 = arith.addf %205, %186 : vector<8x32xf32>
    %207 = arith.mulf %202, %206 : vector<8x32xf32>
    %208 = arith.addf %204, %207 : vector<8x32xf32>
    %209 = math.tanh %208 : vector<8x32xf32>
    %210 = arith.subf %191, %209 : vector<8x32xf32>
    %211 = arith.mulf %203, %210 : vector<8x32xf32>
    %212 = arith.addf %209, %211 : vector<8x32xf32>
    %213 = vector.extract_strided_slice %190 {offsets = [8, 0], sizes = [8, 96], strides = [1, 1]} : vector<64x96xf32> to vector<8x96xf32>
    %214 = arith.truncf %212 : vector<8x32xf32> to vector<8x32xbf16>
    %cst_38 = arith.constant dense<0.000000e+00> : vector<8x96xf32>
    %215 = tpu.matmul %214, %182, %cst_38 {dimension_numbers = #tpu.dot_dimension_numbers<[1], [0], [0], [1], [0, 0, 1, 1], [], []>} : vector<8x32xbf16>, vector<32x96xbf16>, vector<8x96xf32> -> vector<8x96xf32>
    %216 = arith.addf %213, %215 : vector<8x96xf32>
    %217 = vector.extract_strided_slice %216 {offsets = [0, 0], sizes = [8, 64], strides = [1, 1]} : vector<8x96xf32> to vector<8x64xf32>
    %218 = arith.negf %217 : vector<8x64xf32>
    %219 = math.exp %218 : vector<8x64xf32>
    %cst_39 = arith.constant 1.000000e+00 : f32
    %220 = vector.broadcast %cst_39 : f32 to vector<8x64xf32>
    %221 = arith.addf %220, %219 : vector<8x64xf32>
    %222 = arith.divf %220, %221 : vector<8x64xf32>
    %223 = vector.extract_strided_slice %222 {offsets = [0, 0], sizes = [8, 32], strides = [1, 1]} : vector<8x64xf32> to vector<8x32xf32>
    %224 = vector.extract_strided_slice %222 {offsets = [0, 32], sizes = [8, 32], strides = [1, 1]} : vector<8x64xf32> to vector<8x32xf32>
    %225 = vector.extract_strided_slice %213 {offsets = [0, 64], sizes = [8, 32], strides = [1, 1]} : vector<8x96xf32> to vector<8x32xf32>
    %226 = vector.extract_strided_slice %215 {offsets = [0, 64], sizes = [8, 32], strides = [1, 1]} : vector<8x96xf32> to vector<8x32xf32>
    %227 = arith.addf %226, %186 : vector<8x32xf32>
    %228 = arith.mulf %223, %227 : vector<8x32xf32>
    %229 = arith.addf %225, %228 : vector<8x32xf32>
    %230 = math.tanh %229 : vector<8x32xf32>
    %231 = arith.subf %212, %230 : vector<8x32xf32>
    %232 = arith.mulf %224, %231 : vector<8x32xf32>
    %233 = arith.addf %230, %232 : vector<8x32xf32>
    %234 = vector.extract_strided_slice %190 {offsets = [16, 0], sizes = [8, 96], strides = [1, 1]} : vector<64x96xf32> to vector<8x96xf32>
    %235 = arith.truncf %233 : vector<8x32xf32> to vector<8x32xbf16>
    %cst_40 = arith.constant dense<0.000000e+00> : vector<8x96xf32>
    %236 = tpu.matmul %235, %182, %cst_40 {dimension_numbers = #tpu.dot_dimension_numbers<[1], [0], [0], [1], [0, 0, 1, 1], [], []>} : vector<8x32xbf16>, vector<32x96xbf16>, vector<8x96xf32> -> vector<8x96xf32>
    %237 = arith.addf %234, %236 : vector<8x96xf32>
    %238 = vector.extract_strided_slice %237 {offsets = [0, 0], sizes = [8, 64], strides = [1, 1]} : vector<8x96xf32> to vector<8x64xf32>
    %239 = arith.negf %238 : vector<8x64xf32>
    %240 = math.exp %239 : vector<8x64xf32>
    %cst_41 = arith.constant 1.000000e+00 : f32
    %241 = vector.broadcast %cst_41 : f32 to vector<8x64xf32>
    %242 = arith.addf %241, %240 : vector<8x64xf32>
    %243 = arith.divf %241, %242 : vector<8x64xf32>
    %244 = vector.extract_strided_slice %243 {offsets = [0, 0], sizes = [8, 32], strides = [1, 1]} : vector<8x64xf32> to vector<8x32xf32>
    %245 = vector.extract_strided_slice %243 {offsets = [0, 32], sizes = [8, 32], strides = [1, 1]} : vector<8x64xf32> to vector<8x32xf32>
    %246 = vector.extract_strided_slice %234 {offsets = [0, 64], sizes = [8, 32], strides = [1, 1]} : vector<8x96xf32> to vector<8x32xf32>
    %247 = vector.extract_strided_slice %236 {offsets = [0, 64], sizes = [8, 32], strides = [1, 1]} : vector<8x96xf32> to vector<8x32xf32>
    %248 = arith.addf %247, %186 : vector<8x32xf32>
    %249 = arith.mulf %244, %248 : vector<8x32xf32>
    %250 = arith.addf %246, %249 : vector<8x32xf32>
    %251 = math.tanh %250 : vector<8x32xf32>
    %252 = arith.subf %233, %251 : vector<8x32xf32>
    %253 = arith.mulf %245, %252 : vector<8x32xf32>
    %254 = arith.addf %251, %253 : vector<8x32xf32>
    %255 = vector.extract_strided_slice %190 {offsets = [24, 0], sizes = [8, 96], strides = [1, 1]} : vector<64x96xf32> to vector<8x96xf32>
    %256 = arith.truncf %254 : vector<8x32xf32> to vector<8x32xbf16>
    %cst_42 = arith.constant dense<0.000000e+00> : vector<8x96xf32>
    %257 = tpu.matmul %256, %182, %cst_42 {dimension_numbers = #tpu.dot_dimension_numbers<[1], [0], [0], [1], [0, 0, 1, 1], [], []>} : vector<8x32xbf16>, vector<32x96xbf16>, vector<8x96xf32> -> vector<8x96xf32>
    %258 = arith.addf %255, %257 : vector<8x96xf32>
    %259 = vector.extract_strided_slice %258 {offsets = [0, 0], sizes = [8, 64], strides = [1, 1]} : vector<8x96xf32> to vector<8x64xf32>
    %260 = arith.negf %259 : vector<8x64xf32>
    %261 = math.exp %260 : vector<8x64xf32>
    %cst_43 = arith.constant 1.000000e+00 : f32
    %262 = vector.broadcast %cst_43 : f32 to vector<8x64xf32>
    %263 = arith.addf %262, %261 : vector<8x64xf32>
    %264 = arith.divf %262, %263 : vector<8x64xf32>
    %265 = vector.extract_strided_slice %264 {offsets = [0, 0], sizes = [8, 32], strides = [1, 1]} : vector<8x64xf32> to vector<8x32xf32>
    %266 = vector.extract_strided_slice %264 {offsets = [0, 32], sizes = [8, 32], strides = [1, 1]} : vector<8x64xf32> to vector<8x32xf32>
    %267 = vector.extract_strided_slice %255 {offsets = [0, 64], sizes = [8, 32], strides = [1, 1]} : vector<8x96xf32> to vector<8x32xf32>
    %268 = vector.extract_strided_slice %257 {offsets = [0, 64], sizes = [8, 32], strides = [1, 1]} : vector<8x96xf32> to vector<8x32xf32>
    %269 = arith.addf %268, %186 : vector<8x32xf32>
    %270 = arith.mulf %265, %269 : vector<8x32xf32>
    %271 = arith.addf %267, %270 : vector<8x32xf32>
    %272 = math.tanh %271 : vector<8x32xf32>
    %273 = arith.subf %254, %272 : vector<8x32xf32>
    %274 = arith.mulf %266, %273 : vector<8x32xf32>
    %275 = arith.addf %272, %274 : vector<8x32xf32>
    %276 = vector.extract_strided_slice %190 {offsets = [32, 0], sizes = [8, 96], strides = [1, 1]} : vector<64x96xf32> to vector<8x96xf32>
    %277 = arith.truncf %275 : vector<8x32xf32> to vector<8x32xbf16>
    %cst_44 = arith.constant dense<0.000000e+00> : vector<8x96xf32>
    %278 = tpu.matmul %277, %182, %cst_44 {dimension_numbers = #tpu.dot_dimension_numbers<[1], [0], [0], [1], [0, 0, 1, 1], [], []>} : vector<8x32xbf16>, vector<32x96xbf16>, vector<8x96xf32> -> vector<8x96xf32>
    %279 = arith.addf %276, %278 : vector<8x96xf32>
    %280 = vector.extract_strided_slice %279 {offsets = [0, 0], sizes = [8, 64], strides = [1, 1]} : vector<8x96xf32> to vector<8x64xf32>
    %281 = arith.negf %280 : vector<8x64xf32>
    %282 = math.exp %281 : vector<8x64xf32>
    %cst_45 = arith.constant 1.000000e+00 : f32
    %283 = vector.broadcast %cst_45 : f32 to vector<8x64xf32>
    %284 = arith.addf %283, %282 : vector<8x64xf32>
    %285 = arith.divf %283, %284 : vector<8x64xf32>
    %286 = vector.extract_strided_slice %285 {offsets = [0, 0], sizes = [8, 32], strides = [1, 1]} : vector<8x64xf32> to vector<8x32xf32>
    %287 = vector.extract_strided_slice %285 {offsets = [0, 32], sizes = [8, 32], strides = [1, 1]} : vector<8x64xf32> to vector<8x32xf32>
    %288 = vector.extract_strided_slice %276 {offsets = [0, 64], sizes = [8, 32], strides = [1, 1]} : vector<8x96xf32> to vector<8x32xf32>
    %289 = vector.extract_strided_slice %278 {offsets = [0, 64], sizes = [8, 32], strides = [1, 1]} : vector<8x96xf32> to vector<8x32xf32>
    %290 = arith.addf %289, %186 : vector<8x32xf32>
    %291 = arith.mulf %286, %290 : vector<8x32xf32>
    %292 = arith.addf %288, %291 : vector<8x32xf32>
    %293 = math.tanh %292 : vector<8x32xf32>
    %294 = arith.subf %275, %293 : vector<8x32xf32>
    %295 = arith.mulf %287, %294 : vector<8x32xf32>
    %296 = arith.addf %293, %295 : vector<8x32xf32>
    %297 = vector.extract_strided_slice %190 {offsets = [40, 0], sizes = [8, 96], strides = [1, 1]} : vector<64x96xf32> to vector<8x96xf32>
    %298 = arith.truncf %296 : vector<8x32xf32> to vector<8x32xbf16>
    %cst_46 = arith.constant dense<0.000000e+00> : vector<8x96xf32>
    %299 = tpu.matmul %298, %182, %cst_46 {dimension_numbers = #tpu.dot_dimension_numbers<[1], [0], [0], [1], [0, 0, 1, 1], [], []>} : vector<8x32xbf16>, vector<32x96xbf16>, vector<8x96xf32> -> vector<8x96xf32>
    %300 = arith.addf %297, %299 : vector<8x96xf32>
    %301 = vector.extract_strided_slice %300 {offsets = [0, 0], sizes = [8, 64], strides = [1, 1]} : vector<8x96xf32> to vector<8x64xf32>
    %302 = arith.negf %301 : vector<8x64xf32>
    %303 = math.exp %302 : vector<8x64xf32>
    %cst_47 = arith.constant 1.000000e+00 : f32
    %304 = vector.broadcast %cst_47 : f32 to vector<8x64xf32>
    %305 = arith.addf %304, %303 : vector<8x64xf32>
    %306 = arith.divf %304, %305 : vector<8x64xf32>
    %307 = vector.extract_strided_slice %306 {offsets = [0, 0], sizes = [8, 32], strides = [1, 1]} : vector<8x64xf32> to vector<8x32xf32>
    %308 = vector.extract_strided_slice %306 {offsets = [0, 32], sizes = [8, 32], strides = [1, 1]} : vector<8x64xf32> to vector<8x32xf32>
    %309 = vector.extract_strided_slice %297 {offsets = [0, 64], sizes = [8, 32], strides = [1, 1]} : vector<8x96xf32> to vector<8x32xf32>
    %310 = vector.extract_strided_slice %299 {offsets = [0, 64], sizes = [8, 32], strides = [1, 1]} : vector<8x96xf32> to vector<8x32xf32>
    %311 = arith.addf %310, %186 : vector<8x32xf32>
    %312 = arith.mulf %307, %311 : vector<8x32xf32>
    %313 = arith.addf %309, %312 : vector<8x32xf32>
    %314 = math.tanh %313 : vector<8x32xf32>
    %315 = arith.subf %296, %314 : vector<8x32xf32>
    %316 = arith.mulf %308, %315 : vector<8x32xf32>
    %317 = arith.addf %314, %316 : vector<8x32xf32>
    %318 = vector.extract_strided_slice %190 {offsets = [48, 0], sizes = [8, 96], strides = [1, 1]} : vector<64x96xf32> to vector<8x96xf32>
    %319 = arith.truncf %317 : vector<8x32xf32> to vector<8x32xbf16>
    %cst_48 = arith.constant dense<0.000000e+00> : vector<8x96xf32>
    %320 = tpu.matmul %319, %182, %cst_48 {dimension_numbers = #tpu.dot_dimension_numbers<[1], [0], [0], [1], [0, 0, 1, 1], [], []>} : vector<8x32xbf16>, vector<32x96xbf16>, vector<8x96xf32> -> vector<8x96xf32>
    %321 = arith.addf %318, %320 : vector<8x96xf32>
    %322 = vector.extract_strided_slice %321 {offsets = [0, 0], sizes = [8, 64], strides = [1, 1]} : vector<8x96xf32> to vector<8x64xf32>
    %323 = arith.negf %322 : vector<8x64xf32>
    %324 = math.exp %323 : vector<8x64xf32>
    %cst_49 = arith.constant 1.000000e+00 : f32
    %325 = vector.broadcast %cst_49 : f32 to vector<8x64xf32>
    %326 = arith.addf %325, %324 : vector<8x64xf32>
    %327 = arith.divf %325, %326 : vector<8x64xf32>
    %328 = vector.extract_strided_slice %327 {offsets = [0, 0], sizes = [8, 32], strides = [1, 1]} : vector<8x64xf32> to vector<8x32xf32>
    %329 = vector.extract_strided_slice %327 {offsets = [0, 32], sizes = [8, 32], strides = [1, 1]} : vector<8x64xf32> to vector<8x32xf32>
    %330 = vector.extract_strided_slice %318 {offsets = [0, 64], sizes = [8, 32], strides = [1, 1]} : vector<8x96xf32> to vector<8x32xf32>
    %331 = vector.extract_strided_slice %320 {offsets = [0, 64], sizes = [8, 32], strides = [1, 1]} : vector<8x96xf32> to vector<8x32xf32>
    %332 = arith.addf %331, %186 : vector<8x32xf32>
    %333 = arith.mulf %328, %332 : vector<8x32xf32>
    %334 = arith.addf %330, %333 : vector<8x32xf32>
    %335 = math.tanh %334 : vector<8x32xf32>
    %336 = arith.subf %317, %335 : vector<8x32xf32>
    %337 = arith.mulf %329, %336 : vector<8x32xf32>
    %338 = arith.addf %335, %337 : vector<8x32xf32>
    %339 = vector.extract_strided_slice %190 {offsets = [56, 0], sizes = [8, 96], strides = [1, 1]} : vector<64x96xf32> to vector<8x96xf32>
    %340 = arith.truncf %338 : vector<8x32xf32> to vector<8x32xbf16>
    %cst_50 = arith.constant dense<0.000000e+00> : vector<8x96xf32>
    %341 = tpu.matmul %340, %182, %cst_50 {dimension_numbers = #tpu.dot_dimension_numbers<[1], [0], [0], [1], [0, 0, 1, 1], [], []>} : vector<8x32xbf16>, vector<32x96xbf16>, vector<8x96xf32> -> vector<8x96xf32>
    %342 = arith.addf %339, %341 : vector<8x96xf32>
    %343 = vector.extract_strided_slice %342 {offsets = [0, 0], sizes = [8, 64], strides = [1, 1]} : vector<8x96xf32> to vector<8x64xf32>
    %344 = arith.negf %343 : vector<8x64xf32>
    %345 = math.exp %344 : vector<8x64xf32>
    %cst_51 = arith.constant 1.000000e+00 : f32
    %346 = vector.broadcast %cst_51 : f32 to vector<8x64xf32>
    %347 = arith.addf %346, %345 : vector<8x64xf32>
    %348 = arith.divf %346, %347 : vector<8x64xf32>
    %349 = vector.extract_strided_slice %348 {offsets = [0, 0], sizes = [8, 32], strides = [1, 1]} : vector<8x64xf32> to vector<8x32xf32>
    %350 = vector.extract_strided_slice %348 {offsets = [0, 32], sizes = [8, 32], strides = [1, 1]} : vector<8x64xf32> to vector<8x32xf32>
    %351 = vector.extract_strided_slice %339 {offsets = [0, 64], sizes = [8, 32], strides = [1, 1]} : vector<8x96xf32> to vector<8x32xf32>
    %352 = vector.extract_strided_slice %341 {offsets = [0, 64], sizes = [8, 32], strides = [1, 1]} : vector<8x96xf32> to vector<8x32xf32>
    %353 = arith.addf %352, %186 : vector<8x32xf32>
    %354 = arith.mulf %349, %353 : vector<8x32xf32>
    %355 = arith.addf %351, %354 : vector<8x32xf32>
    %356 = math.tanh %355 : vector<8x32xf32>
    %357 = arith.subf %338, %356 : vector<8x32xf32>
    %358 = arith.mulf %350, %357 : vector<8x32xf32>
    %359 = arith.addf %356, %358 : vector<8x32xf32>
    %360 = arith.truncf %359 : vector<8x32xf32> to vector<8x32xbf16>
    %c0_52 = arith.constant 0 : index
    %c0_53 = arith.constant 0 : index
    %361 = vector.load %arg9[%c0_52, %c0_53] : memref<32x8xbf16, #tpu.memory_space<vmem>>, vector<32x8xbf16>
    %cst_54 = arith.constant dense<0.000000e+00> : vector<8x8xf32>
    %362 = tpu.matmul %360, %361, %cst_54 {dimension_numbers = #tpu.dot_dimension_numbers<[1], [0], [0], [1], [0, 0, 1, 1], [], []>} : vector<8x32xbf16>, vector<32x8xbf16>, vector<8x8xf32> -> vector<8x8xf32>
    %c0_55 = arith.constant 0 : index
    %c0_56 = arith.constant 0 : index
    %363 = vector.load %arg10[%c0_55, %c0_56] : memref<1x8xf32, #tpu.memory_space<vmem>>, vector<1x8xf32>
    %364 = vector.broadcast %363 : vector<1x8xf32> to vector<8x8xf32>
    %365 = arith.addf %362, %364 : vector<8x8xf32>
    %c0_57 = arith.constant 0 : index
    %c0_58 = arith.constant 0 : index
    %366 = vector.load %arg11[%c0_57, %c0_58] : memref<8x8xf32, #tpu.memory_space<vmem>>, vector<8x8xf32>
    tpu.vector_store %arg11[%c0_57, %c0_58], %365 {strides = array<i32>} : memref<8x8xf32, #tpu.memory_space<vmem>>, vector<8x8xf32>,
    return
  }
}

</mosaic_0001>

<llo_original>
// kernel: tpu_custom_call.1
$region0: #{tpu_custom_call.1}
  #allocation0 [shape = 'u32[]', space=smem, size = 0x4, offset = 0x4, fixed_abs, tag = 'smem constant byte address 0x4 - core index']
  #allocation1 [shape = 'u32[144,128]{1,0:T(1,128)}', space=vmem, size = 0x12000, scoped, tag = 'internal scratch']
  %s0 = inlined_call_operand.vmem [shape: f32[64,16], index: 0, kind: input, shape index: {}]
  %s1 = inlined_call_operand.vmem [shape: bf16[16,96], index: 1, kind: input, shape index: {}]
  %s2 = inlined_call_operand.vmem [shape: bf16[32,96], index: 2, kind: input, shape index: {}]
  %s3 = inlined_call_operand.vmem [shape: f32[1,96], index: 3, kind: input, shape index: {}]
  %s4 = inlined_call_operand.vmem [shape: f32[1,32], index: 4, kind: input, shape index: {}]
  %s5 = inlined_call_operand.vmem [shape: bf16[32,96], index: 5, kind: input, shape index: {}]
  %s6 = inlined_call_operand.vmem [shape: bf16[32,96], index: 6, kind: input, shape index: {}]
  %s7 = inlined_call_operand.vmem [shape: f32[1,96], index: 7, kind: input, shape index: {}]
  %s8 = inlined_call_operand.vmem [shape: f32[1,32], index: 8, kind: input, shape index: {}]
  %s9 = inlined_call_operand.vmem [shape: bf16[32,8], index: 9, kind: input, shape index: {}]
  %s10 = inlined_call_operand.vmem [shape: f32[1,8], index: 10, kind: input, shape index: {}]
  %s11 = inlined_call_operand.hbm [shape: f32[8,8], index: 11, kind: output, shape index: {}]
  %s12 = sld [smem:[#allocation0]]
  $region54: #{tpu_custom_call.1} parent=0
    _
  %s14 = ssub.s32 1, %s12
  %s15 = scalar_select 0, %s14, %s12
  $region1: #{tpu_custom_call.1} parent=0
    #allocation2 [shape = 'u8[4096]{0}', space=vmem, size = 0x1000, scoped, tag = 'output window, operand 0, single buffered']
    #allocation3 [shape = 's32[1]{0}', space=sflag, size = 0x4, scoped, tag = 'scoped memory for tpu_custom_call.1']
    %16 = vsyncpa [#allocation3], 0
    // Predicated region
    $region2: #{tpu_custom_call.1} parent=1 // pred_check
      _
    $region3: #{tpu_custom_call.1} parent=1 // pred_check_branch
      %18 = sbr.rel (0) target = $region5
    $region4: #{tpu_custom_call.1} parent=1 // pred_region
      _
    $region5: #{tpu_custom_call.1} parent=1 // pred_fallthru
      _
    // Predicated region
    $region6: #{tpu_custom_call.1} parent=1 // pred_check
      _
    $region7: #{tpu_custom_call.1} parent=1 // pred_check_branch
      %20 = sbr.rel (0) target = $region9
    $region8: #{tpu_custom_call.1} parent=1 // pred_region
      _
    $region9: #{tpu_custom_call.1} parent=1 // pred_fallthru
      _
    // Predicated region
    $region10: #{tpu_custom_call.1} parent=1 // pred_check
      _
    $region11: #{tpu_custom_call.1} parent=1 // pred_check_branch
      %22 = sbr.rel (0) target = $region13
    $region12: #{tpu_custom_call.1} parent=1 // pred_region
      _
    $region13: #{tpu_custom_call.1} parent=1 // pred_fallthru
      _
    // Predicated region
    $region14: #{tpu_custom_call.1} parent=1 // pred_check
      _
    $region15: #{tpu_custom_call.1} parent=1 // pred_check_branch
      %24 = sbr.rel (0) target = $region17
    $region16: #{tpu_custom_call.1} parent=1 // pred_region
      _
    $region17: #{tpu_custom_call.1} parent=1 // pred_fallthru
      _
    // Predicated region
    $region18: #{tpu_custom_call.1} parent=1 // pred_check
      _
    $region19: #{tpu_custom_call.1} parent=1 // pred_check_branch
      %26 = sbr.rel (0) target = $region21
    $region20: #{tpu_custom_call.1} parent=1 // pred_region
      _
    $region21: #{tpu_custom_call.1} parent=1 // pred_fallthru
      _
    // Predicated region
    $region22: #{tpu_custom_call.1} parent=1 // pred_check
      _
    $region23: #{tpu_custom_call.1} parent=1 // pred_check_branch
      %28 = sbr.rel (0) target = $region25
    $region24: #{tpu_custom_call.1} parent=1 // pred_region
      _
    $region25: #{tpu_custom_call.1} parent=1 // pred_fallthru
      _
    // Predicated region
    $region26: #{tpu_custom_call.1} parent=1 // pred_check
      _
    $region27: #{tpu_custom_call.1} parent=1 // pred_check_branch
      %30 = sbr.rel (0) target = $region29
    $region28: #{tpu_custom_call.1} parent=1 // pred_region
      _
    $region29: #{tpu_custom_call.1} parent=1 // pred_fallthru
      _
    // Predicated region
    $region30: #{tpu_custom_call.1} parent=1 // pred_check
      _
    $region31: #{tpu_custom_call.1} parent=1 // pred_check_branch
      %32 = sbr.rel (0) target = $region33
    $region32: #{tpu_custom_call.1} parent=1 // pred_region
      _
    $region33: #{tpu_custom_call.1} parent=1 // pred_fallthru
      _
    // Predicated region
    $region34: #{tpu_custom_call.1} parent=1 // pred_check
      _
    $region35: #{tpu_custom_call.1} parent=1 // pred_check_branch
      %34 = sbr.rel (0) target = $region37
    $region36: #{tpu_custom_call.1} parent=1 // pred_region
      _
    $region37: #{tpu_custom_call.1} parent=1 // pred_fallthru
      _
    // Predicated region
    $region38: #{tpu_custom_call.1} parent=1 // pred_check
      _
    $region39: #{tpu_custom_call.1} parent=1 // pred_check_branch
      %36 = sbr.rel (0) target = $region41
    $region40: #{tpu_custom_call.1} parent=1 // pred_region
      _
    $region41: #{tpu_custom_call.1} parent=1 // pred_fallthru
      _
    // Predicated region
    $region42: #{tpu_custom_call.1} parent=1 // pred_check
      _
    $region43: #{tpu_custom_call.1} parent=1 // pred_check_branch
      %38 = sbr.rel (0) target = $region45
    $region44: #{tpu_custom_call.1} parent=1 // pred_region
      _
    $region45: #{tpu_custom_call.1} parent=1 // pred_fallthru
      _
    %v40 = vld [vmem:[%s0] sm:$0xff]
    %v41 = vld [vmem:[%s0 + $0x8] sm:$0xff]
    %v42 = vld [vmem:[%s0 + $0x10] sm:$0xff]
    %v43 = vld [vmem:[%s0 + $0x18] sm:$0xff]
    %v44 = vld [vmem:[%s0 + $0x20] sm:$0xff]
    %v45 = vld [vmem:[%s0 + $0x28] sm:$0xff]
    %v46 = vld [vmem:[%s0 + $0x30] sm:$0xff]
    %v47 = vld [vmem:[%s0 + $0x38] sm:$0xff]
    %v48 = vld [vmem:[%s1] sm:$0xf]
    %v49 = vld [vmem:[%s1 + $0x4] sm:$0xf]
    %v50 = vld [vmem:[%s2] sm:$0xf]
    %v51 = vld [vmem:[%s2 + $0x4] sm:$0xf]
    %v52 = vld [vmem:[%s2 + $0x8] sm:$0xf]
    %v53 = vld [vmem:[%s2 + $0xc] sm:$0xf]
    %v54 = vld [vmem:[%s3] sm:$0x1]
    %v55 = vld [vmem:[%s4] sm:$0x1]
    %v57 = vlaneseq
    %v58 = vshrl.u32 %v57, 7
    %v59 = vsub.s32 0, %v58
    %v60 = vrot.slane %v55, %v59
    %v61 = vpack.c.bf16 %v41, %v40
    %v62 = vpack.c.bf16 %v43, %v42
    %v63 = vpack.c.bf16 %v45, %v44
    %v64 = vpack.c.bf16 %v47, %v46
    %v66 = vlaneseq
    %v67 = vshrl.u32 %v66, 7
    %v68 = vsub.s32 0, %v67
    %v69 = vrot.slane %v54, %v68
    %v73 = vunpack.c.l.b16 %v48
    %v74 = vunpack.c.l.b16 %v49
    %v75 = vpack.c.b16 %v74, %v73
    %vm77 = vcmask 130048
    %v79 = vsel %vm77, %v61, 0
    %v82 = vsel %vm77, %v62, 0
    %v85 = vsel %vm77, %v63, 0
    %v88 = vsel %vm77, %v64, 0
    %90 = vmatprep.subr.bf16.mxu0 0
    %91 = vmatpush1.bf16.msra.mxu0 %v75
    %92 = vmatprep.subr.bf16.mxu0 0
    %93 = vmatpush1.bf16.msra.mxu0 0
    %94 = vmatprep.subr.bf16.mxu0 0
    %95 = vmatpush1.bf16.msra.mxu0 0
    %96 = vmatprep.subr.bf16.mxu0 0
    %97 = vmatpush1.bf16.msra.mxu0 0
    %98 = vmatprep.subr.bf16.mxu0 0
    %99 = vmatpush1.bf16.msra.mxu0 0
    %100 = vmatprep.subr.bf16.mxu0 0
    %101 = vmatpush1.bf16.msra.mxu0 0
    %102 = vmatprep.subr.bf16.mxu0 0
    %103 = vmatpush1.bf16.msra.mxu0 0
    %104 = vmatprep.subr.bf16.mxu0 0
    %105 = vmatpush1.bf16.msra.mxu0 0
    %106 = vmatprep.subr.bf16.mxu0 0
    %107 = vmatpush1.bf16.msra.mxu0 0
    %108 = vmatprep.subr.bf16.mxu0 0
    %109 = vmatpush1.bf16.msra.mxu0 0
    %110 = vmatprep.subr.bf16.mxu0 0
    %111 = vmatpush1.bf16.msra.mxu0 0
    %112 = vmatprep.subr.bf16.mxu0 0
    %113 = vmatpush1.bf16.msra.mxu0 0
    %114 = vmatprep.subr.bf16.mxu0 0
    %115 = vmatpush1.bf16.msra.mxu0 0
    %116 = vmatprep.subr.bf16.mxu0 0
    %117 = vmatpush1.bf16.msra.mxu0 0
    %118 = vmatprep.subr.bf16.mxu0 0
    %119 = vmatpush1.bf16.msra.mxu0 0
    %120 = vmatprep.subr.bf16.mxu0 0
    %121 = vmatpush1.bf16.msra.mxu0 0
    %122 = vmatprep.mubr.bf16.mxu0 0
    %123 = vmatmul.mubr.bf16.gmra.mrb[0].mxu0 %v79
    %v124 = vpop.f32.mrb[0].mxu0
    %v125 = vadd.f32 %v69, %v124
    %v126 = vpop.f32.mrb[0].mxu0
    %v127 = vpop.f32.mrb[0].mxu0
    %v128 = vadd.f32 %v69, %v127
    %v129 = vpop.f32.mrb[0].mxu0
    %130 = vmatprep.mubr.bf16.mxu0 0
    %131 = vmatmul.mubr.bf16.gmra.mrb[0].mxu0 %v82
    %v132 = vpop.f32.mrb[0].mxu0
    %v133 = vadd.f32 %v69, %v132
    %v134 = vpop.f32.mrb[0].mxu0
    %v135 = vpop.f32.mrb[0].mxu0
    %v136 = vadd.f32 %v69, %v135
    %v137 = vpop.f32.mrb[0].mxu0
    %138 = vmatprep.mubr.bf16.mxu0 0
    %139 = vmatmul.mubr.bf16.gmra.mrb[0].mxu0 %v85
    %v140 = vpop.f32.mrb[0].mxu0
    %v141 = vadd.f32 %v69, %v140
    %v142 = vpop.f32.mrb[0].mxu0
    %v143 = vpop.f32.mrb[0].mxu0
    %v144 = vadd.f32 %v69, %v143
    %v145 = vpop.f32.mrb[0].mxu0
    %146 = vmatprep.mubr.bf16.mxu0 0
    %147 = vmatmul.mubr.bf16.gmra.mrb[0].mxu0 %v88
    %v148 = vpop.f32.mrb[0].mxu0
    %v149 = vadd.f32 %v69, %v148
    %v150 = vpop.f32.mrb[0].mxu0
    %v151 = vpop.f32.mrb[0].mxu0
    %v152 = vadd.f32 %v69, %v151
    %v153 = vpop.f32.mrb[0].mxu0
    %154 = vdwg.mxu0
    %v159 = vunpack.c.l.b16 %v50
    %v160 = vunpack.c.l.b16 %v51
    %v161 = vunpack.c.l.b16 %v52
    %v162 = vunpack.c.l.b16 %v53
    %v163 = vpack.c.b16 %v160, %v159
    %v164 = vpack.c.b16 %v162, %v161
    %vm167 = vcmask 261120
    %v169 = vsel %vm167, 0, 0
    %171 = vmatprep.subr.bf16.mxu0 0
    %172 = vmatpush1.bf16.msra.mxu0 %v163
    %173 = vmatprep.subr.bf16.mxu0 0
    %174 = vmatpush1.bf16.msra.mxu0 %v164
    %175 = vmatprep.subr.bf16.mxu0 0
    %176 = vmatpush1.bf16.msra.mxu0 0
    %177 = vmatprep.subr.bf16.mxu0 0
    %178 = vmatpush1.bf16.msra.mxu0 0
    %179 = vmatprep.subr.bf16.mxu0 0
    %180 = vmatpush1.bf16.msra.mxu0 0
    %181 = vmatprep.subr.bf16.mxu0 0
    %182 = vmatpush1.bf16.msra.mxu0 0
    %183 = vmatprep.subr.bf16.mxu0 0
    %184 = vmatpush1.bf16.msra.mxu0 0
    %185 = vmatprep.subr.bf16.mxu0 0
    %186 = vmatpush1.bf16.msra.mxu0 0
    %187 = vmatprep.subr.bf16.mxu0 0
    %188 = vmatpush1.bf16.msra.mxu0 0
    %189 = vmatprep.subr.bf16.mxu0 0
    %190 = vmatpush1.bf16.msra.mxu0 0
    %191 = vmatprep.subr.bf16.mxu0 0
    %192 = vmatpush1.bf16.msra.mxu0 0
    %193 = vmatprep.subr.bf16.mxu0 0
    %194 = vmatpush1.bf16.msra.mxu0 0
    %195 = vmatprep.subr.bf16.mxu0 0
    %196 = vmatpush1.bf16.msra.mxu0 0
    %197 = vmatprep.subr.bf16.mxu0 0
    %198 = vmatpush1.bf16.msra.mxu0 0
    %199 = vmatprep.subr.bf16.mxu0 0
    %200 = vmatpush1.bf16.msra.mxu0 0
    %201 = vmatprep.subr.bf16.mxu0 0
    %202 = vmatpush1.bf16.msra.mxu0 0
    %203 = vmatprep.mubr.bf16.mxu0 0
    %204 = vmatmul.mubr.bf16.gmra.mrb[0].mxu0 %v169
    %v205 = vpop.f32.mrb[0].mxu0
    %v206 = vadd.f32 0.0, %v205
    %v207 = vpop.f32.mrb[0].mxu0
    %v208 = vpop.f32.mrb[0].mxu0
    %v209 = vpop.f32.mrb[0].mxu0
    %210 = vdwg.mxu0
    %v211 = vadd.f32 %v125, %v206
    %v212 = vxor.u32 %v211, 2147483648
    %v213 = vmul.f32 %v212, 1.442695
    %v214 = vpow.pop %v213
    %v215 = vadd.f32 %v214, 1.0
    %v216 = vrcp.pop %v215
    %v217 = vmul.f32 1.0, %v216
    %218 = vrot.lane.b32.xlu0 %v60, 64
    %v219 = vpop.permute.xlu0 %218
    %v221 = vadd.f32 %v206, %v219
    %223 = vrot.lane.b32.xlu0 %v221, 64
    %v224 = vpop.permute.xlu0 %223
    %v226 = vmul.f32 %v217, %v224
    %228 = vrot.lane.b32.xlu0 %v226, 64
    %v229 = vpop.permute.xlu0 %228
    %v231 = vadd.f32 %v125, %v229
    %v232 = vtanh.pop %v231
    %v233 = vsub.f32 0.0, %v232
    %235 = vrot.lane.b32.xlu0 %v233, 96
    %v236 = vpop.permute.xlu0 %235
    %v238 = vmul.f32 %v217, %v236
    %240 = vrot.lane.b32.xlu0 %v238, 32
    %v241 = vpop.permute.xlu0 %240
    %v243 = vadd.f32 %v232, %v241
    %v244 = vpack.c.bf16 %v243, %v243
    %246 = vrot.lane.b32.xlu0 %v244, 64
    %v247 = vpop.permute.xlu0 %246
    %v249 = vsel %vm167, %v247, 0
    %251 = vmatprep.subr.bf16.mxu0 0
    %252 = vmatpush1.bf16.msra.mxu0 %v163
    %253 = vmatprep.subr.bf16.mxu0 0
    %254 = vmatpush1.bf16.msra.mxu0 %v164
    %255 = vmatprep.subr.bf16.mxu0 0
    %256 = vmatpush1.bf16.msra.mxu0 0
    %257 = vmatprep.subr.bf16.mxu0 0
    %258 = vmatpush1.bf16.msra.mxu0 0
    %259 = vmatprep.subr.bf16.mxu0 0
    %260 = vmatpush1.bf16.msra.mxu0 0
    %261 = vmatprep.subr.bf16.mxu0 0
    %262 = vmatpush1.bf16.msra.mxu0 0
    %263 = vmatprep.subr.bf16.mxu0 0
    %264 = vmatpush1.bf16.msra.mxu0 0
    %265 = vmatprep.subr.bf16.mxu0 0
    %266 = vmatpush1.bf16.msra.mxu0 0
    %267 = vmatprep.subr.bf16.mxu0 0
    %268 = vmatpush1.bf16.msra.mxu0 0
    %269 = vmatprep.subr.bf16.mxu0 0
    %270 = vmatpush1.bf16.msra.mxu0 0
    %271 = vmatprep.subr.bf16.mxu0 0
    %272 = vmatpush1.bf16.msra.mxu0 0
    %273 = vmatprep.subr.bf16.mxu0 0
    %274 = vmatpush1.bf16.msra.mxu0 0
    %275 = vmatprep.subr.bf16.mxu0 0
    %276 = vmatpush1.bf16.msra.mxu0 0
    %277 = vmatprep.subr.bf16.mxu0 0
    %278 = vmatpush1.bf16.msra.mxu0 0
    %279 = vmatprep.subr.bf16.mxu0 0
    %280 = vmatpush1.bf16.msra.mxu0 0
    %281 = vmatprep.subr.bf16.mxu0 0
    %282 = vmatpush1.bf16.msra.mxu0 0
    %283 = vmatprep.mubr.bf16.mxu0 0
    %284 = vmatmul.mubr.bf16.gmra.mrb[0].mxu0 %v249
    %v285 = vpop.f32.mrb[0].mxu0
    %v286 = vadd.f32 0.0, %v285
    %v287 = vpop.f32.mrb[0].mxu0
    %v288 = vpop.f32.mrb[0].mxu0
    %v289 = vpop.f32.mrb[0].mxu0
    %290 = vdwg.mxu0
    %v291 = vadd.f32 %v128, %v286
    %v292 = vxor.u32 %v291, 2147483648
    %v293 = vmul.f32 %v292, 1.442695
    %v294 = vpow.pop %v293
    %v295 = vadd.f32 %v294, 1.0
    %v296 = vrcp.pop %v295
    %v297 = vmul.f32 1.0, %v296
    %v298 = vadd.f32 %v286, %v219
    %300 = vrot.lane.b32.xlu0 %v298, 64
    %v301 = vpop.permute.xlu0 %300
    %v303 = vmul.f32 %v297, %v301
    %305 = vrot.lane.b32.xlu0 %v303, 64
    %v306 = vpop.permute.xlu0 %305
    %v308 = vadd.f32 %v128, %v306
    %v309 = vtanh.pop %v308
    %v310 = vsub.f32 %v243, %v309
    %312 = vrot.lane.b32.xlu0 %v310, 96
    %v313 = vpop.permute.xlu0 %312
    %v315 = vmul.f32 %v297, %v313
    %317 = vrot.lane.b32.xlu0 %v315, 32
    %v318 = vpop.permute.xlu0 %317
    %v320 = vadd.f32 %v309, %v318
    %v321 = vpack.c.bf16 %v320, %v320
    %323 = vrot.lane.b32.xlu0 %v321, 64
    %v324 = vpop.permute.xlu0 %323
    %v326 = vsel %vm167, %v324, 0
    %328 = vmatprep.subr.bf16.mxu0 0
    %329 = vmatpush1.bf16.msra.mxu0 %v163
    %330 = vmatprep.subr.bf16.mxu0 0
    %331 = vmatpush1.bf16.msra.mxu0 %v164
    %332 = vmatprep.subr.bf16.mxu0 0
    %333 = vmatpush1.bf16.msra.mxu0 0
    %334 = vmatprep.subr.bf16.mxu0 0
    %335 = vmatpush1.bf16.msra.mxu0 0
    %336 = vmatprep.subr.bf16.mxu0 0
    %337 = vmatpush1.bf16.msra.mxu0 0
    %338 = vmatprep.subr.bf16.mxu0 0
    %339 = vmatpush1.bf16.msra.mxu0 0
    %340 = vmatprep.subr.bf16.mxu0 0
    %341 = vmatpush1.bf16.msra.mxu0 0
    %342 = vmatprep.subr.bf16.mxu0 0
    %343 = vmatpush1.bf16.msra.mxu0 0
    %344 = vmatprep.subr.bf16.mxu0 0
    %345 = vmatpush1.bf16.msra.mxu0 0
    %346 = vmatprep.subr.bf16.mxu0 0
    %347 = vmatpush1.bf16.msra.mxu0 0
    %348 = vmatprep.subr.bf16.mxu0 0
    %349 = vmatpush1.bf16.msra.mxu0 0
    %350 = vmatprep.subr.bf16.mxu0 0
    %351 = vmatpush1.bf16.msra.mxu0 0
    %352 = vmatprep.subr.bf16.mxu0 0
    %353 = vmatpush1.bf16.msra.mxu0 0
    %354 = vmatprep.subr.bf16.mxu0 0
    %355 = vmatpush1.bf16.msra.mxu0 0
    %356 = vmatprep.subr.bf16.mxu0 0
    %357 = vmatpush1.bf16.msra.mxu0 0
    %358 = vmatprep.subr.bf16.mxu0 0
    %359 = vmatpush1.bf16.msra.mxu0 0
    %360 = vmatprep.mubr.bf16.mxu0 0
    %361 = vmatmul.mubr.bf16.gmra.mrb[0].mxu0 %v326
    %v362 = vpop.f32.mrb[0].mxu0
    %v363 = vadd.f32 0.0, %v362
    %v364 = vpop.f32.mrb[0].mxu0
    %v365 = vpop.f32.mrb[0].mxu0
    %v366 = vpop.f32.mrb[0].mxu0
    %367 = vdwg.mxu0
    %v368 = vadd.f32 %v133, %v363
    %v369 = vxor.u32 %v368, 2147483648
    %v370 = vmul.f32 %v369, 1.442695
    %v371 = vpow.pop %v370
    %v372 = vadd.f32 %v371, 1.0
    %v373 = vrcp.pop %v372
    %v374 = vmul.f32 1.0, %v373
    %v375 = vadd.f32 %v363, %v219
    %377 = vrot.lane.b32.xlu0 %v375, 64
    %v378 = vpop.permute.xlu0 %377
    %v380 = vmul.f32 %v374, %v378
    %382 = vrot.lane.b32.xlu0 %v380, 64
    %v383 = vpop.permute.xlu0 %382
    %v385 = vadd.f32 %v133, %v383
    %v386 = vtanh.pop %v385
    %v387 = vsub.f32 %v320, %v386
    %389 = vrot.lane.b32.xlu0 %v387, 96
    %v390 = vpop.permute.xlu0 %389
    %v392 = vmul.f32 %v374, %v390
    %394 = vrot.lane.b32.xlu0 %v392, 32
    %v395 = vpop.permute.xlu0 %394
    %v397 = vadd.f32 %v386, %v395
    %v398 = vpack.c.bf16 %v397, %v397
    %400 = vrot.lane.b32.xlu0 %v398, 64
    %v401 = vpop.permute.xlu0 %400
    %v403 = vsel %vm167, %v401, 0
    %405 = vmatprep.subr.bf16.mxu0 0
    %406 = vmatpush1.bf16.msra.mxu0 %v163
    %407 = vmatprep.subr.bf16.mxu0 0
    %408 = vmatpush1.bf16.msra.mxu0 %v164
    %409 = vmatprep.subr.bf16.mxu0 0
    %410 = vmatpush1.bf16.msra.mxu0 0
    %411 = vmatprep.subr.bf16.mxu0 0
    %412 = vmatpush1.bf16.msra.mxu0 0
    %413 = vmatprep.subr.bf16.mxu0 0
    %414 = vmatpush1.bf16.msra.mxu0 0
    %415 = vmatprep.subr.bf16.mxu0 0
    %416 = vmatpush1.bf16.msra.mxu0 0
    %417 = vmatprep.subr.bf16.mxu0 0
    %418 = vmatpush1.bf16.msra.mxu0 0
    %419 = vmatprep.subr.bf16.mxu0 0
    %420 = vmatpush1.bf16.msra.mxu0 0
    %421 = vmatprep.subr.bf16.mxu0 0
    %422 = vmatpush1.bf16.msra.mxu0 0
    %423 = vmatprep.subr.bf16.mxu0 0
    %424 = vmatpush1.bf16.msra.mxu0 0
    %425 = vmatprep.subr.bf16.mxu0 0
    %426 = vmatpush1.bf16.msra.mxu0 0
    %427 = vmatprep.subr.bf16.mxu0 0
    %428 = vmatpush1.bf16.msra.mxu0 0
    %429 = vmatprep.subr.bf16.mxu0 0
    %430 = vmatpush1.bf16.msra.mxu0 0
    %431 = vmatprep.subr.bf16.mxu0 0
    %432 = vmatpush1.bf16.msra.mxu0 0
    %433 = vmatprep.subr.bf16.mxu0 0
    %434 = vmatpush1.bf16.msra.mxu0 0
    %435 = vmatprep.subr.bf16.mxu0 0
    %436 = vmatpush1.bf16.msra.mxu0 0
    %437 = vmatprep.mubr.bf16.mxu0 0
    %438 = vmatmul.mubr.bf16.gmra.mrb[0].mxu0 %v403
    %v439 = vpop.f32.mrb[0].mxu0
    %v440 = vadd.f32 0.0, %v439
    %v441 = vpop.f32.mrb[0].mxu0
    %v442 = vpop.f32.mrb[0].mxu0
    %v443 = vpop.f32.mrb[0].mxu0
    %444 = vdwg.mxu0
    %v445 = vadd.f32 %v136, %v440
    %v446 = vxor.u32 %v445, 2147483648
    %v447 = vmul.f32 %v446, 1.442695
    %v448 = vpow.pop %v447
    %v449 = vadd.f32 %v448, 1.0
    %v450 = vrcp.pop %v449
    %v451 = vmul.f32 1.0, %v450
    %v452 = vadd.f32 %v440, %v219
    %454 = vrot.lane.b32.xlu0 %v452, 64
    %v455 = vpop.permute.xlu0 %454
    %v457 = vmul.f32 %v451, %v455
    %459 = vrot.lane.b32.xlu0 %v457, 64
    %v460 = vpop.permute.xlu0 %459
    %v462 = vadd.f32 %v136, %v460
    %v463 = vtanh.pop %v462
    %v464 = vsub.f32 %v397, %v463
    %466 = vrot.lane.b32.xlu0 %v464, 96
    %v467 = vpop.permute.xlu0 %466
    %v469 = vmul.f32 %v451, %v467
    %471 = vrot.lane.b32.xlu0 %v469, 32
    %v472 = vpop.permute.xlu0 %471
    %v474 = vadd.f32 %v463, %v472
    %v475 = vpack.c.bf16 %v474, %v474
    %477 = vrot.lane.b32.xlu0 %v475, 64
    %v478 = vpop.permute.xlu0 %477
    %v480 = vsel %vm167, %v478, 0
    %482 = vmatprep.subr.bf16.mxu0 0
    %483 = vmatpush1.bf16.msra.mxu0 %v163
    %484 = vmatprep.subr.bf16.mxu0 0
    %485 = vmatpush1.bf16.msra.mxu0 %v164
    %486 = vmatprep.subr.bf16.mxu0 0
    %487 = vmatpush1.bf16.msra.mxu0 0
    %488 = vmatprep.subr.bf16.mxu0 0
    %489 = vmatpush1.bf16.msra.mxu0 0
    %490 = vmatprep.subr.bf16.mxu0 0
    %491 = vmatpush1.bf16.msra.mxu0 0
    %492 = vmatprep.subr.bf16.mxu0 0
    %493 = vmatpush1.bf16.msra.mxu0 0
    %494 = vmatprep.subr.bf16.mxu0 0
    %495 = vmatpush1.bf16.msra.mxu0 0
    %496 = vmatprep.subr.bf16.mxu0 0
    %497 = vmatpush1.bf16.msra.mxu0 0
    %498 = vmatprep.subr.bf16.mxu0 0
    %499 = vmatpush1.bf16.msra.mxu0 0
    %500 = vmatprep.subr.bf16.mxu0 0
    %501 = vmatpush1.bf16.msra.mxu0 0
    %502 = vmatprep.subr.bf16.mxu0 0
    %503 = vmatpush1.bf16.msra.mxu0 0
    %504 = vmatprep.subr.bf16.mxu0 0
    %505 = vmatpush1.bf16.msra.mxu0 0
    %506 = vmatprep.subr.bf16.mxu0 0
    %507 = vmatpush1.bf16.msra.mxu0 0
    %508 = vmatprep.subr.bf16.mxu0 0
    %509 = vmatpush1.bf16.msra.mxu0 0
    %510 = vmatprep.subr.bf16.mxu0 0
    %511 = vmatpush1.bf16.msra.mxu0 0
    %512 = vmatprep.subr.bf16.mxu0 0
    %513 = vmatpush1.bf16.msra.mxu0 0
    %514 = vmatprep.mubr.bf16.mxu0 0
    %515 = vmatmul.mubr.bf16.gmra.mrb[0].mxu0 %v480
    %v516 = vpop.f32.mrb[0].mxu0
    %v517 = vadd.f32 0.0, %v516
    %v518 = vpop.f32.mrb[0].mxu0
    %v519 = vpop.f32.mrb[0].mxu0
    %v520 = vpop.f32.mrb[0].mxu0
    %521 = vdwg.mxu0
    %v522 = vadd.f32 %v141, %v517
    %v523 = vxor.u32 %v522, 2147483648
    %v524 = vmul.f32 %v523, 1.442695
    %v525 = vpow.pop %v524
    %v526 = vadd.f32 %v525, 1.0
    %v527 = vrcp.pop %v526
    %v528 = vmul.f32 1.0, %v527
    %v529 = vadd.f32 %v517, %v219
    %531 = vrot.lane.b32.xlu0 %v529, 64
    %v532 = vpop.permute.xlu0 %531
    %v534 = vmul.f32 %v528, %v532
    %536 = vrot.lane.b32.xlu0 %v534, 64
    %v537 = vpop.permute.xlu0 %536
    %v539 = vadd.f32 %v141, %v537
    %v540 = vtanh.pop %v539
    %v541 = vsub.f32 %v474, %v540
    %543 = vrot.lane.b32.xlu0 %v541, 96
    %v544 = vpop.permute.xlu0 %543
    %v546 = vmul.f32 %v528, %v544
    %548 = vrot.lane.b32.xlu0 %v546, 32
    %v549 = vpop.permute.xlu0 %548
    %v551 = vadd.f32 %v540, %v549
    %v552 = vpack.c.bf16 %v551, %v551
    %554 = vrot.lane.b32.xlu0 %v552, 64
    %v555 = vpop.permute.xlu0 %554
    %v557 = vsel %vm167, %v555, 0
    %559 = vmatprep.subr.bf16.mxu0 0
    %560 = vmatpush1.bf16.msra.mxu0 %v163
    %561 = vmatprep.subr.bf16.mxu0 0
    %562 = vmatpush1.bf16.msra.mxu0 %v164
    %563 = vmatprep.subr.bf16.mxu0 0
    %564 = vmatpush1.bf16.msra.mxu0 0
    %565 = vmatprep.subr.bf16.mxu0 0
    %566 = vmatpush1.bf16.msra.mxu0 0
    %567 = vmatprep.subr.bf16.mxu0 0
    %568 = vmatpush1.bf16.msra.mxu0 0
    %569 = vmatprep.subr.bf16.mxu0 0
    %570 = vmatpush1.bf16.msra.mxu0 0
    %571 = vmatprep.subr.bf16.mxu0 0
    %572 = vmatpush1.bf16.msra.mxu0 0
    %573 = vmatprep.subr.bf16.mxu0 0
    %574 = vmatpush1.bf16.msra.mxu0 0
    %575 = vmatprep.subr.bf16.mxu0 0
    %576 = vmatpush1.bf16.msra.mxu0 0
    %577 = vmatprep.subr.bf16.mxu0 0
    %578 = vmatpush1.bf16.msra.mxu0 0
    %579 = vmatprep.subr.bf16.mxu0 0
    %580 = vmatpush1.bf16.msra.mxu0 0
    %581 = vmatprep.subr.bf16.mxu0 0
    %582 = vmatpush1.bf16.msra.mxu0 0
    %583 = vmatprep.subr.bf16.mxu0 0
    %584 = vmatpush1.bf16.msra.mxu0 0
    %585 = vmatprep.subr.bf16.mxu0 0
    %586 = vmatpush1.bf16.msra.mxu0 0
    %587 = vmatprep.subr.bf16.mxu0 0
    %588 = vmatpush1.bf16.msra.mxu0 0
    %589 = vmatprep.subr.bf16.mxu0 0
    %590 = vmatpush1.bf16.msra.mxu0 0
    %591 = vmatprep.mubr.bf16.mxu0 0
    %592 = vmatmul.mubr.bf16.gmra.mrb[0].mxu0 %v557
    %v593 = vpop.f32.mrb[0].mxu0
    %v594 = vadd.f32 0.0, %v593
    %v595 = vpop.f32.mrb[0].mxu0
    %v596 = vpop.f32.mrb[0].mxu0
    %v597 = vpop.f32.mrb[0].mxu0
    %598 = vdwg.mxu0
    %v599 = vadd.f32 %v144, %v594
    %v600 = vxor.u32 %v599, 2147483648
    %v601 = vmul.f32 %v600, 1.442695
    %v602 = vpow.pop %v601
    %v603 = vadd.f32 %v602, 1.0
    %v604 = vrcp.pop %v603
    %v605 = vmul.f32 1.0, %v604
    %v606 = vadd.f32 %v594, %v219
    %608 = vrot.lane.b32.xlu0 %v606, 64
    %v609 = vpop.permute.xlu0 %608
    %v611 = vmul.f32 %v605, %v609
    %613 = vrot.lane.b32.xlu0 %v611, 64
    %v614 = vpop.permute.xlu0 %613
    %v616 = vadd.f32 %v144, %v614
    %v617 = vtanh.pop %v616
    %v618 = vsub.f32 %v551, %v617
    %620 = vrot.lane.b32.xlu0 %v618, 96
    %v621 = vpop.permute.xlu0 %620
    %v623 = vmul.f32 %v605, %v621
    %625 = vrot.lane.b32.xlu0 %v623, 32
    %v626 = vpop.permute.xlu0 %625
    %v628 = vadd.f32 %v617, %v626
    %v629 = vpack.c.bf16 %v628, %v628
    %631 = vrot.lane.b32.xlu0 %v629, 64
    %v632 = vpop.permute.xlu0 %631
    %v634 = vsel %vm167, %v632, 0
    %636 = vmatprep.subr.bf16.mxu0 0
    %637 = vmatpush1.bf16.msra.mxu0 %v163
    %638 = vmatprep.subr.bf16.mxu0 0
    %639 = vmatpush1.bf16.msra.mxu0 %v164
    %640 = vmatprep.subr.bf16.mxu0 0
    %641 = vmatpush1.bf16.msra.mxu0 0
    %642 = vmatprep.subr.bf16.mxu0 0
    %643 = vmatpush1.bf16.msra.mxu0 0
    %644 = vmatprep.subr.bf16.mxu0 0
    %645 = vmatpush1.bf16.msra.mxu0 0
    %646 = vmatprep.subr.bf16.mxu0 0
    %647 = vmatpush1.bf16.msra.mxu0 0
    %648 = vmatprep.subr.bf16.mxu0 0
    %649 = vmatpush1.bf16.msra.mxu0 0
    %650 = vmatprep.subr.bf16.mxu0 0
    %651 = vmatpush1.bf16.msra.mxu0 0
    %652 = vmatprep.subr.bf16.mxu0 0
    %653 = vmatpush1.bf16.msra.mxu0 0
    %654 = vmatprep.subr.bf16.mxu0 0
    %655 = vmatpush1.bf16.msra.mxu0 0
    %656 = vmatprep.subr.bf16.mxu0 0
    %657 = vmatpush1.bf16.msra.mxu0 0
    %658 = vmatprep.subr.bf16.mxu0 0
    %659 = vmatpush1.bf16.msra.mxu0 0
    %660 = vmatprep.subr.bf16.mxu0 0
    %661 = vmatpush1.bf16.msra.mxu0 0
    %662 = vmatprep.subr.bf16.mxu0 0
    %663 = vmatpush1.bf16.msra.mxu0 0
    %664 = vmatprep.subr.bf16.mxu0 0
    %665 = vmatpush1.bf16.msra.mxu0 0
    %666 = vmatprep.subr.bf16.mxu0 0
    %667 = vmatpush1.bf16.msra.mxu0 0
    %668 = vmatprep.mubr.bf16.mxu0 0
    %669 = vmatmul.mubr.bf16.gmra.mrb[0].mxu0 %v634
    %v670 = vpop.f32.mrb[0].mxu0
    %v671 = vadd.f32 0.0, %v670
    %v672 = vpop.f32.mrb[0].mxu0
    %v673 = vpop.f32.mrb[0].mxu0
    %v674 = vpop.f32.mrb[0].mxu0
    %675 = vdwg.mxu0
    %v676 = vadd.f32 %v149, %v671
    %v677 = vxor.u32 %v676, 2147483648
    %v678 = vmul.f32 %v677, 1.442695
    %v679 = vpow.pop %v678
    %v680 = vadd.f32 %v679, 1.0
    %v681 = vrcp.pop %v680
    %v682 = vmul.f32 1.0, %v681
    %v683 = vadd.f32 %v671, %v219
    %685 = vrot.lane.b32.xlu0 %v683, 64
    %v686 = vpop.permute.xlu0 %685
    %v688 = vmul.f32 %v682, %v686
    %690 = vrot.lane.b32.xlu0 %v688, 64
    %v691 = vpop.permute.xlu0 %690
    %v693 = vadd.f32 %v149, %v691
    %v694 = vtanh.pop %v693
    %v695 = vsub.f32 %v628, %v694
    %697 = vrot.lane.b32.xlu0 %v695, 96
    %v698 = vpop.permute.xlu0 %697
    %v700 = vmul.f32 %v682, %v698
    %702 = vrot.lane.b32.xlu0 %v700, 32
    %v703 = vpop.permute.xlu0 %702
    %v705 = vadd.f32 %v694, %v703
    %v706 = vpack.c.bf16 %v705, %v705
    %708 = vrot.lane.b32.xlu0 %v706, 64
    %v709 = vpop.permute.xlu0 %708
    %v711 = vsel %vm167, %v709, 0
    %713 = vmatprep.subr.bf16.mxu0 0
    %714 = vmatpush1.bf16.msra.mxu0 %v163
    %715 = vmatprep.subr.bf16.mxu0 0
    %716 = vmatpush1.bf16.msra.mxu0 %v164
    %717 = vmatprep.subr.bf16.mxu0 0
    %718 = vmatpush1.bf16.msra.mxu0 0
    %719 = vmatprep.subr.bf16.mxu0 0
    %720 = vmatpush1.bf16.msra.mxu0 0
    %721 = vmatprep.subr.bf16.mxu0 0
    %722 = vmatpush1.bf16.msra.mxu0 0
    %723 = vmatprep.subr.bf16.mxu0 0
    %724 = vmatpush1.bf16.msra.mxu0 0
    %725 = vmatprep.subr.bf16.mxu0 0
    %726 = vmatpush1.bf16.msra.mxu0 0
    %727 = vmatprep.subr.bf16.mxu0 0
    %728 = vmatpush1.bf16.msra.mxu0 0
    %729 = vmatprep.subr.bf16.mxu0 0
    %730 = vmatpush1.bf16.msra.mxu0 0
    %731 = vmatprep.subr.bf16.mxu0 0
    %732 = vmatpush1.bf16.msra.mxu0 0
    %733 = vmatprep.subr.bf16.mxu0 0
    %734 = vmatpush1.bf16.msra.mxu0 0
    %735 = vmatprep.subr.bf16.mxu0 0
    %736 = vmatpush1.bf16.msra.mxu0 0
    %737 = vmatprep.subr.bf16.mxu0 0
    %738 = vmatpush1.bf16.msra.mxu0 0
    %739 = vmatprep.subr.bf16.mxu0 0
    %740 = vmatpush1.bf16.msra.mxu0 0
    %741 = vmatprep.subr.bf16.mxu0 0
    %742 = vmatpush1.bf16.msra.mxu0 0
    %743 = vmatprep.subr.bf16.mxu0 0
    %744 = vmatpush1.bf16.msra.mxu0 0
    %745 = vmatprep.mubr.bf16.mxu0 0
    %746 = vmatmul.mubr.bf16.gmra.mrb[0].mxu0 %v711
    %v747 = vpop.f32.mrb[0].mxu0
    %v748 = vadd.f32 0.0, %v747
    %v749 = vpop.f32.mrb[0].mxu0
    %v750 = vpop.f32.mrb[0].mxu0
    %v751 = vpop.f32.mrb[0].mxu0
    %752 = vdwg.mxu0
    %v753 = vadd.f32 %v152, %v748
    %v754 = vxor.u32 %v753, 2147483648
    %v755 = vmul.f32 %v754, 1.442695
    %v756 = vpow.pop %v755
    %v757 = vadd.f32 %v756, 1.0
    %v758 = vrcp.pop %v757
    %v759 = vmul.f32 1.0, %v758
    %v760 = vadd.f32 %v748, %v219
    %762 = vrot.lane.b32.xlu0 %v760, 64
    %v763 = vpop.permute.xlu0 %762
    %v765 = vmul.f32 %v759, %v763
    %767 = vrot.lane.b32.xlu0 %v765, 64
    %v768 = vpop.permute.xlu0 %767
    %v770 = vadd.f32 %v152, %v768
    %v771 = vtanh.pop %v770
    %v772 = vsub.f32 %v705, %v771
    %774 = vrot.lane.b32.xlu0 %v772, 96
    %v775 = vpop.permute.xlu0 %774
    %v777 = vmul.f32 %v759, %v775
    %779 = vrot.lane.b32.xlu0 %v777, 32
    %v780 = vpop.permute.xlu0 %779
    %v782 = vadd.f32 %v771, %v780
    %v783 = vld [vmem:[%s5] sm:$0xf]
    %v784 = vld [vmem:[%s5 + $0x4] sm:$0xf]
    %v785 = vld [vmem:[%s5 + $0x8] sm:$0xf]
    %v786 = vld [vmem:[%s5 + $0xc] sm:$0xf]
    %v787 = vld [vmem:[%s6] sm:$0xf]
    %v788 = vld [vmem:[%s6 + $0x4] sm:$0xf]
    %v789 = vld [vmem:[%s6 + $0x8] sm:$0xf]
    %v790 = vld [vmem:[%s6 + $0xc] sm:$0xf]
    %v791 = vld [vmem:[%s7] sm:$0x1]
    %v792 = vld [vmem:[%s8] sm:$0x1]
    %v794 = vlaneseq
    %v795 = vshrl.u32 %v794, 7
    %v796 = vsub.s32 0, %v795
    %v797 = vrot.slane %v792, %v796
    %v798 = vpack.c.bf16 %v320, %v243
    %v799 = vpack.c.bf16 %v474, %v397
    %v800 = vpack.c.bf16 %v628, %v551
    %v801 = vpack.c.bf16 %v782, %v705
    %v803 = vlaneseq
    %v804 = vshrl.u32 %v803, 7
    %v805 = vsub.s32 0, %v804
    %v806 = vrot.slane %v791, %v805
    %812 = vrot.lane.b32.xlu0 %v798, 64
    %v813 = vpop.permute.xlu0 %812
    %814 = vrot.lane.b32.xlu0 %v799, 64
    %v815 = vpop.permute.xlu0 %814
    %816 = vrot.lane.b32.xlu0 %v800, 64
    %v817 = vpop.permute.xlu0 %816
    %818 = vrot.lane.b32.xlu0 %v801, 64
    %v819 = vpop.permute.xlu0 %818
    %v824 = vunpack.c.l.b16 %v783
    %v825 = vunpack.c.l.b16 %v784
    %v826 = vunpack.c.l.b16 %v785
    %v827 = vunpack.c.l.b16 %v786
    %v828 = vpack.c.b16 %v825, %v824
    %v829 = vpack.c.b16 %v827, %v826
    %v833 = vsel %vm167, %v813, 0
    %v836 = vsel %vm167, %v815, 0
    %v839 = vsel %vm167, %v817, 0
    %v842 = vsel %vm167, %v819, 0
    %844 = vmatprep.subr.bf16.mxu0 0
    %845 = vmatpush1.bf16.msra.mxu0 %v828
    %846 = vmatprep.subr.bf16.mxu0 0
    %847 = vmatpush1.bf16.msra.mxu0 %v829
    %848 = vmatprep.subr.bf16.mxu0 0
    %849 = vmatpush1.bf16.msra.mxu0 0
    %850 = vmatprep.subr.bf16.mxu0 0
    %851 = vmatpush1.bf16.msra.mxu0 0
    %852 = vmatprep.subr.bf16.mxu0 0
    %853 = vmatpush1.bf16.msra.mxu0 0
    %854 = vmatprep.subr.bf16.mxu0 0
    %855 = vmatpush1.bf16.msra.mxu0 0
    %856 = vmatprep.subr.bf16.mxu0 0
    %857 = vmatpush1.bf16.msra.mxu0 0
    %858 = vmatprep.subr.bf16.mxu0 0
    %859 = vmatpush1.bf16.msra.mxu0 0
    %860 = vmatprep.subr.bf16.mxu0 0
    %861 = vmatpush1.bf16.msra.mxu0 0
    %862 = vmatprep.subr.bf16.mxu0 0
    %863 = vmatpush1.bf16.msra.mxu0 0
    %864 = vmatprep.subr.bf16.mxu0 0
    %865 = vmatpush1.bf16.msra.mxu0 0
    %866 = vmatprep.subr.bf16.mxu0 0
    %867 = vmatpush1.bf16.msra.mxu0 0
    %868 = vmatprep.subr.bf16.mxu0 0
    %869 = vmatpush1.bf16.msra.mxu0 0
    %870 = vmatprep.subr.bf16.mxu0 0
    %871 = vmatpush1.bf16.msra.mxu0 0
    %872 = vmatprep.subr.bf16.mxu0 0
    %873 = vmatpush1.bf16.msra.mxu0 0
    %874 = vmatprep.subr.bf16.mxu0 0
    %875 = vmatpush1.bf16.msra.mxu0 0
    %876 = vmatprep.mubr.bf16.mxu0 0
    %877 = vmatmul.mubr.bf16.gmra.mrb[0].mxu0 %v833
    %v878 = vpop.f32.mrb[0].mxu0
    %v879 = vadd.f32 %v806, %v878
    %v880 = vpop.f32.mrb[0].mxu0
    %v881 = vpop.f32.mrb[0].mxu0
    %v882 = vadd.f32 %v806, %v881
    %v883 = vpop.f32.mrb[0].mxu0
    %884 = vmatprep.mubr.bf16.mxu0 0
    %885 = vmatmul.mubr.bf16.gmra.mrb[0].mxu0 %v836
    %v886 = vpop.f32.mrb[0].mxu0
    %v887 = vadd.f32 %v806, %v886
    %v888 = vpop.f32.mrb[0].mxu0
    %v889 = vpop.f32.mrb[0].mxu0
    %v890 = vadd.f32 %v806, %v889
    %v891 = vpop.f32.mrb[0].mxu0
    %892 = vmatprep.mubr.bf16.mxu0 0
    %893 = vmatmul.mubr.bf16.gmra.mrb[0].mxu0 %v839
    %v894 = vpop.f32.mrb[0].mxu0
    %v895 = vadd.f32 %v806, %v894
    %v896 = vpop.f32.mrb[0].mxu0
    %v897 = vpop.f32.mrb[0].mxu0
    %v898 = vadd.f32 %v806, %v897
    %v899 = vpop.f32.mrb[0].mxu0
    %900 = vmatprep.mubr.bf16.mxu0 0
    %901 = vmatmul.mubr.bf16.gmra.mrb[0].mxu0 %v842
    %v902 = vpop.f32.mrb[0].mxu0
    %v903 = vadd.f32 %v806, %v902
    %v904 = vpop.f32.mrb[0].mxu0
    %v905 = vpop.f32.mrb[0].mxu0
    %v906 = vadd.f32 %v806, %v905
    %v907 = vpop.f32.mrb[0].mxu0
    %908 = vdwg.mxu0
    %v913 = vunpack.c.l.b16 %v787
    %v914 = vunpack.c.l.b16 %v788
    %v915 = vunpack.c.l.b16 %v789
    %v916 = vunpack.c.l.b16 %v790
    %v917 = vpack.c.b16 %v914, %v913
    %v918 = vpack.c.b16 %v916, %v915
    %921 = vmatprep.subr.bf16.mxu0 0
    %922 = vmatpush1.bf16.msra.mxu0 %v917
    %923 = vmatprep.subr.bf16.mxu0 0
    %924 = vmatpush1.bf16.msra.mxu0 %v918
    %925 = vmatprep.subr.bf16.mxu0 0
    %926 = vmatpush1.bf16.msra.mxu0 0
    %927 = vmatprep.subr.bf16.mxu0 0
    %928 = vmatpush1.bf16.msra.mxu0 0
    %929 = vmatprep.subr.bf16.mxu0 0
    %930 = vmatpush1.bf16.msra.mxu0 0
    %931 = vmatprep.subr.bf16.mxu0 0
    %932 = vmatpush1.bf16.msra.mxu0 0
    %933 = vmatprep.subr.bf16.mxu0 0
    %934 = vmatpush1.bf16.msra.mxu0 0
    %935 = vmatprep.subr.bf16.mxu0 0
    %936 = vmatpush1.bf16.msra.mxu0 0
    %937 = vmatprep.subr.bf16.mxu0 0
    %938 = vmatpush1.bf16.msra.mxu0 0
    %939 = vmatprep.subr.bf16.mxu0 0
    %940 = vmatpush1.bf16.msra.mxu0 0
    %941 = vmatprep.subr.bf16.mxu0 0
    %942 = vmatpush1.bf16.msra.mxu0 0
    %943 = vmatprep.subr.bf16.mxu0 0
    %944 = vmatpush1.bf16.msra.mxu0 0
    %945 = vmatprep.subr.bf16.mxu0 0
    %946 = vmatpush1.bf16.msra.mxu0 0
    %947 = vmatprep.subr.bf16.mxu0 0
    %948 = vmatpush1.bf16.msra.mxu0 0
    %949 = vmatprep.subr.bf16.mxu0 0
    %950 = vmatpush1.bf16.msra.mxu0 0
    %951 = vmatprep.subr.bf16.mxu0 0
    %952 = vmatpush1.bf16.msra.mxu0 0
    %953 = vmatprep.mubr.bf16.mxu0 0
    %954 = vmatmul.mubr.bf16.gmra.mrb[0].mxu0 %v169
    %v955 = vpop.f32.mrb[0].mxu0
    %v956 = vadd.f32 0.0, %v955
    %v957 = vpop.f32.mrb[0].mxu0
    %v958 = vpop.f32.mrb[0].mxu0
    %v959 = vpop.f32.mrb[0].mxu0
    %960 = vdwg.mxu0
    %v961 = vadd.f32 %v879, %v956
    %v962 = vxor.u32 %v961, 2147483648
    %v963 = vmul.f32 %v962, 1.442695
    %v964 = vpow.pop %v963
    %v965 = vadd.f32 %v964, 1.0
    %v966 = vrcp.pop %v965
    %v967 = vmul.f32 1.0, %v966
    %968 = vrot.lane.b32.xlu0 %v797, 64
    %v969 = vpop.permute.xlu0 %968
    %v971 = vadd.f32 %v956, %v969
    %973 = vrot.lane.b32.xlu0 %v971, 64
    %v974 = vpop.permute.xlu0 %973
    %v976 = vmul.f32 %v967, %v974
    %978 = vrot.lane.b32.xlu0 %v976, 64
    %v979 = vpop.permute.xlu0 %978
    %v981 = vadd.f32 %v879, %v979
    %v982 = vtanh.pop %v981
    %v983 = vsub.f32 0.0, %v982
    %985 = vrot.lane.b32.xlu0 %v983, 96
    %v986 = vpop.permute.xlu0 %985
    %v988 = vmul.f32 %v967, %v986
    %990 = vrot.lane.b32.xlu0 %v988, 32
    %v991 = vpop.permute.xlu0 %990
    %v993 = vadd.f32 %v982, %v991
    %v994 = vpack.c.bf16 %v993, %v993
    %996 = vrot.lane.b32.xlu0 %v994, 64
    %v997 = vpop.permute.xlu0 %996
    %v999 = vsel %vm167, %v997, 0
    %1001 = vmatprep.subr.bf16.mxu0 0
    %1002 = vmatpush1.bf16.msra.mxu0 %v917
    %1003 = vmatprep.subr.bf16.mxu0 0
    %1004 = vmatpush1.bf16.msra.mxu0 %v918
    %1005 = vmatprep.subr.bf16.mxu0 0
    %1006 = vmatpush1.bf16.msra.mxu0 0
    %1007 = vmatprep.subr.bf16.mxu0 0
    %1008 = vmatpush1.bf16.msra.mxu0 0
    %1009 = vmatprep.subr.bf16.mxu0 0
    %1010 = vmatpush1.bf16.msra.mxu0 0
    %1011 = vmatprep.subr.bf16.mxu0 0
    %1012 = vmatpush1.bf16.msra.mxu0 0
    %1013 = vmatprep.subr.bf16.mxu0 0
    %1014 = vmatpush1.bf16.msra.mxu0 0
    %1015 = vmatprep.subr.bf16.mxu0 0
    %1016 = vmatpush1.bf16.msra.mxu0 0
    %1017 = vmatprep.subr.bf16.mxu0 0
    %1018 = vmatpush1.bf16.msra.mxu0 0
    %1019 = vmatprep.subr.bf16.mxu0 0
    %1020 = vmatpush1.bf16.msra.mxu0 0
    %1021 = vmatprep.subr.bf16.mxu0 0
    %1022 = vmatpush1.bf16.msra.mxu0 0
    %1023 = vmatprep.subr.bf16.mxu0 0
    %1024 = vmatpush1.bf16.msra.mxu0 0
    %1025 = vmatprep.subr.bf16.mxu0 0
    %1026 = vmatpush1.bf16.msra.mxu0 0
    %1027 = vmatprep.subr.bf16.mxu0 0
    %1028 = vmatpush1.bf16.msra.mxu0 0
    %1029 = vmatprep.subr.bf16.mxu0 0
    %1030 = vmatpush1.bf16.msra.mxu0 0
    %1031 = vmatprep.subr.bf16.mxu0 0
    %1032 = vmatpush1.bf16.msra.mxu0 0
    %1033 = vmatprep.mubr.bf16.mxu0 0
    %1034 = vmatmul.mubr.bf16.gmra.mrb[0].mxu0 %v999
    %v1035 = vpop.f32.mrb[0].mxu0
    %v1036 = vadd.f32 0.0, %v1035
    %v1037 = vpop.f32.mrb[0].mxu0
    %v1038 = vpop.f32.mrb[0].mxu0
    %v1039 = vpop.f32.mrb[0].mxu0
    %1040 = vdwg.mxu0
    %v1041 = vadd.f32 %v882, %v1036
    %v1042 = vxor.u32 %v1041, 2147483648
    %v1043 = vmul.f32 %v1042, 1.442695
    %v1044 = vpow.pop %v1043
    %v1045 = vadd.f32 %v1044, 1.0
    %v1046 = vrcp.pop %v1045
    %v1047 = vmul.f32 1.0, %v1046
    %v1048 = vadd.f32 %v1036, %v969
    %1050 = vrot.lane.b32.xlu0 %v1048, 64
    %v1051 = vpop.permute.xlu0 %1050
    %v1053 = vmul.f32 %v1047, %v1051
    %1055 = vrot.lane.b32.xlu0 %v1053, 64
    %v1056 = vpop.permute.xlu0 %1055
    %v1058 = vadd.f32 %v882, %v1056
    %v1059 = vtanh.pop %v1058
    %v1060 = vsub.f32 %v993, %v1059
    %1062 = vrot.lane.b32.xlu0 %v1060, 96
    %v1063 = vpop.permute.xlu0 %1062
    %v1065 = vmul.f32 %v1047, %v1063
    %1067 = vrot.lane.b32.xlu0 %v1065, 32
    %v1068 = vpop.permute.xlu0 %1067
    %v1070 = vadd.f32 %v1059, %v1068
    %v1071 = vpack.c.bf16 %v1070, %v1070
    %1073 = vrot.lane.b32.xlu0 %v1071, 64
    %v1074 = vpop.permute.xlu0 %1073
    %v1076 = vsel %vm167, %v1074, 0
    %1078 = vmatprep.subr.bf16.mxu0 0
    %1079 = vmatpush1.bf16.msra.mxu0 %v917
    %1080 = vmatprep.subr.bf16.mxu0 0
    %1081 = vmatpush1.bf16.msra.mxu0 %v918
    %1082 = vmatprep.subr.bf16.mxu0 0
    %1083 = vmatpush1.bf16.msra.mxu0 0
    %1084 = vmatprep.subr.bf16.mxu0 0
    %1085 = vmatpush1.bf16.msra.mxu0 0
    %1086 = vmatprep.subr.bf16.mxu0 0
    %1087 = vmatpush1.bf16.msra.mxu0 0
    %1088 = vmatprep.subr.bf16.mxu0 0
    %1089 = vmatpush1.bf16.msra.mxu0 0
    %1090 = vmatprep.subr.bf16.mxu0 0
    %1091 = vmatpush1.bf16.msra.mxu0 0
    %1092 = vmatprep.subr.bf16.mxu0 0
    %1093 = vmatpush1.bf16.msra.mxu0 0
    %1094 = vmatprep.subr.bf16.mxu0 0
    %1095 = vmatpush1.bf16.msra.mxu0 0
    %1096 = vmatprep.subr.bf16.mxu0 0
    %1097 = vmatpush1.bf16.msra.mxu0 0
    %1098 = vmatprep.subr.bf16.mxu0 0
    %1099 = vmatpush1.bf16.msra.mxu0 0
    %1100 = vmatprep.subr.bf16.mxu0 0
    %1101 = vmatpush1.bf16.msra.mxu0 0
    %1102 = vmatprep.subr.bf16.mxu0 0
    %1103 = vmatpush1.bf16.msra.mxu0 0
    %1104 = vmatprep.subr.bf16.mxu0 0
    %1105 = vmatpush1.bf16.msra.mxu0 0
    %1106 = vmatprep.subr.bf16.mxu0 0
    %1107 = vmatpush1.bf16.msra.mxu0 0
    %1108 = vmatprep.subr.bf16.mxu0 0
    %1109 = vmatpush1.bf16.msra.mxu0 0
    %1110 = vmatprep.mubr.bf16.mxu0 0
    %1111 = vmatmul.mubr.bf16.gmra.mrb[0].mxu0 %v1076
    %v1112 = vpop.f32.mrb[0].mxu0
    %v1113 = vadd.f32 0.0, %v1112
    %v1114 = vpop.f32.mrb[0].mxu0
    %v1115 = vpop.f32.mrb[0].mxu0
    %v1116 = vpop.f32.mrb[0].mxu0
    %1117 = vdwg.mxu0
    %v1118 = vadd.f32 %v887, %v1113
    %v1119 = vxor.u32 %v1118, 2147483648
    %v1120 = vmul.f32 %v1119, 1.442695
    %v1121 = vpow.pop %v1120
    %v1122 = vadd.f32 %v1121, 1.0
    %v1123 = vrcp.pop %v1122
    %v1124 = vmul.f32 1.0, %v1123
    %v1125 = vadd.f32 %v1113, %v969
    %1127 = vrot.lane.b32.xlu0 %v1125, 64
    %v1128 = vpop.permute.xlu0 %1127
    %v1130 = vmul.f32 %v1124, %v1128
    %1132 = vrot.lane.b32.xlu0 %v1130, 64
    %v1133 = vpop.permute.xlu0 %1132
    %v1135 = vadd.f32 %v887, %v1133
    %v1136 = vtanh.pop %v1135
    %v1137 = vsub.f32 %v1070, %v1136
    %1139 = vrot.lane.b32.xlu0 %v1137, 96
    %v1140 = vpop.permute.xlu0 %1139
    %v1142 = vmul.f32 %v1124, %v1140
    %1144 = vrot.lane.b32.xlu0 %v1142, 32
    %v1145 = vpop.permute.xlu0 %1144
    %v1147 = vadd.f32 %v1136, %v1145
    %v1148 = vpack.c.bf16 %v1147, %v1147
    %1150 = vrot.lane.b32.xlu0 %v1148, 64
    %v1151 = vpop.permute.xlu0 %1150
    %v1153 = vsel %vm167, %v1151, 0
    %1155 = vmatprep.subr.bf16.mxu0 0
    %1156 = vmatpush1.bf16.msra.mxu0 %v917
    %1157 = vmatprep.subr.bf16.mxu0 0
    %1158 = vmatpush1.bf16.msra.mxu0 %v918
    %1159 = vmatprep.subr.bf16.mxu0 0
    %1160 = vmatpush1.bf16.msra.mxu0 0
    %1161 = vmatprep.subr.bf16.mxu0 0
    %1162 = vmatpush1.bf16.msra.mxu0 0
    %1163 = vmatprep.subr.bf16.mxu0 0
    %1164 = vmatpush1.bf16.msra.mxu0 0
    %1165 = vmatprep.subr.bf16.mxu0 0
    %1166 = vmatpush1.bf16.msra.mxu0 0
    %1167 = vmatprep.subr.bf16.mxu0 0
    %1168 = vmatpush1.bf16.msra.mxu0 0
    %1169 = vmatprep.subr.bf16.mxu0 0
    %1170 = vmatpush1.bf16.msra.mxu0 0
    %1171 = vmatprep.subr.bf16.mxu0 0
    %1172 = vmatpush1.bf16.msra.mxu0 0
    %1173 = vmatprep.subr.bf16.mxu0 0
    %1174 = vmatpush1.bf16.msra.mxu0 0
    %1175 = vmatprep.subr.bf16.mxu0 0
    %1176 = vmatpush1.bf16.msra.mxu0 0
    %1177 = vmatprep.subr.bf16.mxu0 0
    %1178 = vmatpush1.bf16.msra.mxu0 0
    %1179 = vmatprep.subr.bf16.mxu0 0
    %1180 = vmatpush1.bf16.msra.mxu0 0
    %1181 = vmatprep.subr.bf16.mxu0 0
    %1182 = vmatpush1.bf16.msra.mxu0 0
    %1183 = vmatprep.subr.bf16.mxu0 0
    %1184 = vmatpush1.bf16.msra.mxu0 0
    %1185 = vmatprep.subr.bf16.mxu0 0
    %1186 = vmatpush1.bf16.msra.mxu0 0
    %1187 = vmatprep.mubr.bf16.mxu0 0
    %1188 = vmatmul.mubr.bf16.gmra.mrb[0].mxu0 %v1153
    %v1189 = vpop.f32.mrb[0].mxu0
    %v1190 = vadd.f32 0.0, %v1189
    %v1191 = vpop.f32.mrb[0].mxu0
    %v1192 = vpop.f32.mrb[0].mxu0
    %v1193 = vpop.f32.mrb[0].mxu0
    %1194 = vdwg.mxu0
    %v1195 = vadd.f32 %v890, %v1190
    %v1196 = vxor.u32 %v1195, 2147483648
    %v1197 = vmul.f32 %v1196, 1.442695
    %v1198 = vpow.pop %v1197
    %v1199 = vadd.f32 %v1198, 1.0
    %v1200 = vrcp.pop %v1199
    %v1201 = vmul.f32 1.0, %v1200
    %v1202 = vadd.f32 %v1190, %v969
    %1204 = vrot.lane.b32.xlu0 %v1202, 64
    %v1205 = vpop.permute.xlu0 %1204
    %v1207 = vmul.f32 %v1201, %v1205
    %1209 = vrot.lane.b32.xlu0 %v1207, 64
    %v1210 = vpop.permute.xlu0 %1209
    %v1212 = vadd.f32 %v890, %v1210
    %v1213 = vtanh.pop %v1212
    %v1214 = vsub.f32 %v1147, %v1213
    %1216 = vrot.lane.b32.xlu0 %v1214, 96
    %v1217 = vpop.permute.xlu0 %1216
    %v1219 = vmul.f32 %v1201, %v1217
    %1221 = vrot.lane.b32.xlu0 %v1219, 32
    %v1222 = vpop.permute.xlu0 %1221
    %v1224 = vadd.f32 %v1213, %v1222
    %v1225 = vpack.c.bf16 %v1224, %v1224
    %1227 = vrot.lane.b32.xlu0 %v1225, 64
    %v1228 = vpop.permute.xlu0 %1227
    %v1230 = vsel %vm167, %v1228, 0
    %1232 = vmatprep.subr.bf16.mxu0 0
    %1233 = vmatpush1.bf16.msra.mxu0 %v917
    %1234 = vmatprep.subr.bf16.mxu0 0
    %1235 = vmatpush1.bf16.msra.mxu0 %v918
    %1236 = vmatprep.subr.bf16.mxu0 0
    %1237 = vmatpush1.bf16.msra.mxu0 0
    %1238 = vmatprep.subr.bf16.mxu0 0
    %1239 = vmatpush1.bf16.msra.mxu0 0
    %1240 = vmatprep.subr.bf16.mxu0 0
    %1241 = vmatpush1.bf16.msra.mxu0 0
    %1242 = vmatprep.subr.bf16.mxu0 0
    %1243 = vmatpush1.bf16.msra.mxu0 0
    %1244 = vmatprep.subr.bf16.mxu0 0
    %1245 = vmatpush1.bf16.msra.mxu0 0
    %1246 = vmatprep.subr.bf16.mxu0 0
    %1247 = vmatpush1.bf16.msra.mxu0 0
    %1248 = vmatprep.subr.bf16.mxu0 0
    %1249 = vmatpush1.bf16.msra.mxu0 0
    %1250 = vmatprep.subr.bf16.mxu0 0
    %1251 = vmatpush1.bf16.msra.mxu0 0
    %1252 = vmatprep.subr.bf16.mxu0 0
    %1253 = vmatpush1.bf16.msra.mxu0 0
    %1254 = vmatprep.subr.bf16.mxu0 0
    %1255 = vmatpush1.bf16.msra.mxu0 0
    %1256 = vmatprep.subr.bf16.mxu0 0
    %1257 = vmatpush1.bf16.msra.mxu0 0
    %1258 = vmatprep.subr.bf16.mxu0 0
    %1259 = vmatpush1.bf16.msra.mxu0 0
    %1260 = vmatprep.subr.bf16.mxu0 0
    %1261 = vmatpush1.bf16.msra.mxu0 0
    %1262 = vmatprep.subr.bf16.mxu0 0
    %1263 = vmatpush1.bf16.msra.mxu0 0
    %1264 = vmatprep.mubr.bf16.mxu0 0
    %1265 = vmatmul.mubr.bf16.gmra.mrb[0].mxu0 %v1230
    %v1266 = vpop.f32.mrb[0].mxu0
    %v1267 = vadd.f32 0.0, %v1266
    %v1268 = vpop.f32.mrb[0].mxu0
    %v1269 = vpop.f32.mrb[0].mxu0
    %v1270 = vpop.f32.mrb[0].mxu0
    %1271 = vdwg.mxu0
    %v1272 = vadd.f32 %v895, %v1267
    %v1273 = vxor.u32 %v1272, 2147483648
    %v1274 = vmul.f32 %v1273, 1.442695
    %v1275 = vpow.pop %v1274
    %v1276 = vadd.f32 %v1275, 1.0
    %v1277 = vrcp.pop %v1276
    %v1278 = vmul.f32 1.0, %v1277
    %v1279 = vadd.f32 %v1267, %v969
    %1281 = vrot.lane.b32.xlu0 %v1279, 64
    %v1282 = vpop.permute.xlu0 %1281
    %v1284 = vmul.f32 %v1278, %v1282
    %1286 = vrot.lane.b32.xlu0 %v1284, 64
    %v1287 = vpop.permute.xlu0 %1286
    %v1289 = vadd.f32 %v895, %v1287
    %v1290 = vtanh.pop %v1289
    %v1291 = vsub.f32 %v1224, %v1290
    %1293 = vrot.lane.b32.xlu0 %v1291, 96
    %v1294 = vpop.permute.xlu0 %1293
    %v1296 = vmul.f32 %v1278, %v1294
    %1298 = vrot.lane.b32.xlu0 %v1296, 32
    %v1299 = vpop.permute.xlu0 %1298
    %v1301 = vadd.f32 %v1290, %v1299
    %v1302 = vpack.c.bf16 %v1301, %v1301
    %1304 = vrot.lane.b32.xlu0 %v1302, 64
    %v1305 = vpop.permute.xlu0 %1304
    %v1307 = vsel %vm167, %v1305, 0
    %1309 = vmatprep.subr.bf16.mxu0 0
    %1310 = vmatpush1.bf16.msra.mxu0 %v917
    %1311 = vmatprep.subr.bf16.mxu0 0
    %1312 = vmatpush1.bf16.msra.mxu0 %v918
    %1313 = vmatprep.subr.bf16.mxu0 0
    %1314 = vmatpush1.bf16.msra.mxu0 0
    %1315 = vmatprep.subr.bf16.mxu0 0
    %1316 = vmatpush1.bf16.msra.mxu0 0
    %1317 = vmatprep.subr.bf16.mxu0 0
    %1318 = vmatpush1.bf16.msra.mxu0 0
    %1319 = vmatprep.subr.bf16.mxu0 0
    %1320 = vmatpush1.bf16.msra.mxu0 0
    %1321 = vmatprep.subr.bf16.mxu0 0
    %1322 = vmatpush1.bf16.msra.mxu0 0
    %1323 = vmatprep.subr.bf16.mxu0 0
    %1324 = vmatpush1.bf16.msra.mxu0 0
    %1325 = vmatprep.subr.bf16.mxu0 0
    %1326 = vmatpush1.bf16.msra.mxu0 0
    %1327 = vmatprep.subr.bf16.mxu0 0
    %1328 = vmatpush1.bf16.msra.mxu0 0
    %1329 = vmatprep.subr.bf16.mxu0 0
    %1330 = vmatpush1.bf16.msra.mxu0 0
    %1331 = vmatprep.subr.bf16.mxu0 0
    %1332 = vmatpush1.bf16.msra.mxu0 0
    %1333 = vmatprep.subr.bf16.mxu0 0
    %1334 = vmatpush1.bf16.msra.mxu0 0
    %1335 = vmatprep.subr.bf16.mxu0 0
    %1336 = vmatpush1.bf16.msra.mxu0 0
    %1337 = vmatprep.subr.bf16.mxu0 0
    %1338 = vmatpush1.bf16.msra.mxu0 0
    %1339 = vmatprep.subr.bf16.mxu0 0
    %1340 = vmatpush1.bf16.msra.mxu0 0
    %1341 = vmatprep.mubr.bf16.mxu0 0
    %1342 = vmatmul.mubr.bf16.gmra.mrb[0].mxu0 %v1307
    %v1343 = vpop.f32.mrb[0].mxu0
    %v1344 = vadd.f32 0.0, %v1343
    %v1345 = vpop.f32.mrb[0].mxu0
    %v1346 = vpop.f32.mrb[0].mxu0
    %v1347 = vpop.f32.mrb[0].mxu0
    %1348 = vdwg.mxu0
    %v1349 = vadd.f32 %v898, %v1344
    %v1350 = vxor.u32 %v1349, 2147483648
    %v1351 = vmul.f32 %v1350, 1.442695
    %v1352 = vpow.pop %v1351
    %v1353 = vadd.f32 %v1352, 1.0
    %v1354 = vrcp.pop %v1353
    %v1355 = vmul.f32 1.0, %v1354
    %v1356 = vadd.f32 %v1344, %v969
    %1358 = vrot.lane.b32.xlu0 %v1356, 64
    %v1359 = vpop.permute.xlu0 %1358
    %v1361 = vmul.f32 %v1355, %v1359
    %1363 = vrot.lane.b32.xlu0 %v1361, 64
    %v1364 = vpop.permute.xlu0 %1363
    %v1366 = vadd.f32 %v898, %v1364
    %v1367 = vtanh.pop %v1366
    %v1368 = vsub.f32 %v1301, %v1367
    %1370 = vrot.lane.b32.xlu0 %v1368, 96
    %v1371 = vpop.permute.xlu0 %1370
    %v1373 = vmul.f32 %v1355, %v1371
    %1375 = vrot.lane.b32.xlu0 %v1373, 32
    %v1376 = vpop.permute.xlu0 %1375
    %v1378 = vadd.f32 %v1367, %v1376
    %v1379 = vpack.c.bf16 %v1378, %v1378
    %1381 = vrot.lane.b32.xlu0 %v1379, 64
    %v1382 = vpop.permute.xlu0 %1381
    %v1384 = vsel %vm167, %v1382, 0
    %1386 = vmatprep.subr.bf16.mxu0 0
    %1387 = vmatpush1.bf16.msra.mxu0 %v917
    %1388 = vmatprep.subr.bf16.mxu0 0
    %1389 = vmatpush1.bf16.msra.mxu0 %v918
    %1390 = vmatprep.subr.bf16.mxu0 0
    %1391 = vmatpush1.bf16.msra.mxu0 0
    %1392 = vmatprep.subr.bf16.mxu0 0
    %1393 = vmatpush1.bf16.msra.mxu0 0
    %1394 = vmatprep.subr.bf16.mxu0 0
    %1395 = vmatpush1.bf16.msra.mxu0 0
    %1396 = vmatprep.subr.bf16.mxu0 0
    %1397 = vmatpush1.bf16.msra.mxu0 0
    %1398 = vmatprep.subr.bf16.mxu0 0
    %1399 = vmatpush1.bf16.msra.mxu0 0
    %1400 = vmatprep.subr.bf16.mxu0 0
    %1401 = vmatpush1.bf16.msra.mxu0 0
    %1402 = vmatprep.subr.bf16.mxu0 0
    %1403 = vmatpush1.bf16.msra.mxu0 0
    %1404 = vmatprep.subr.bf16.mxu0 0
    %1405 = vmatpush1.bf16.msra.mxu0 0
    %1406 = vmatprep.subr.bf16.mxu0 0
    %1407 = vmatpush1.bf16.msra.mxu0 0
    %1408 = vmatprep.subr.bf16.mxu0 0
    %1409 = vmatpush1.bf16.msra.mxu0 0
    %1410 = vmatprep.subr.bf16.mxu0 0
    %1411 = vmatpush1.bf16.msra.mxu0 0
    %1412 = vmatprep.subr.bf16.mxu0 0
    %1413 = vmatpush1.bf16.msra.mxu0 0
    %1414 = vmatprep.subr.bf16.mxu0 0
    %1415 = vmatpush1.bf16.msra.mxu0 0
    %1416 = vmatprep.subr.bf16.mxu0 0
    %1417 = vmatpush1.bf16.msra.mxu0 0
    %1418 = vmatprep.mubr.bf16.mxu0 0
    %1419 = vmatmul.mubr.bf16.gmra.mrb[0].mxu0 %v1384
    %v1420 = vpop.f32.mrb[0].mxu0
    %v1421 = vadd.f32 0.0, %v1420
    %v1422 = vpop.f32.mrb[0].mxu0
    %v1423 = vpop.f32.mrb[0].mxu0
    %v1424 = vpop.f32.mrb[0].mxu0
    %1425 = vdwg.mxu0
    %v1426 = vadd.f32 %v903, %v1421
    %v1427 = vxor.u32 %v1426, 2147483648
    %v1428 = vmul.f32 %v1427, 1.442695
    %v1429 = vpow.pop %v1428
    %v1430 = vadd.f32 %v1429, 1.0
    %v1431 = vrcp.pop %v1430
    %v1432 = vmul.f32 1.0, %v1431
    %v1433 = vadd.f32 %v1421, %v969
    %1435 = vrot.lane.b32.xlu0 %v1433, 64
    %v1436 = vpop.permute.xlu0 %1435
    %v1438 = vmul.f32 %v1432, %v1436
    %1440 = vrot.lane.b32.xlu0 %v1438, 64
    %v1441 = vpop.permute.xlu0 %1440
    %v1443 = vadd.f32 %v903, %v1441
    %v1444 = vtanh.pop %v1443
    %v1445 = vsub.f32 %v1378, %v1444
    %1447 = vrot.lane.b32.xlu0 %v1445, 96
    %v1448 = vpop.permute.xlu0 %1447
    %v1450 = vmul.f32 %v1432, %v1448
    %1452 = vrot.lane.b32.xlu0 %v1450, 32
    %v1453 = vpop.permute.xlu0 %1452
    %v1455 = vadd.f32 %v1444, %v1453
    %v1456 = vpack.c.bf16 %v1455, %v1455
    %1458 = vrot.lane.b32.xlu0 %v1456, 64
    %v1459 = vpop.permute.xlu0 %1458
    %v1461 = vsel %vm167, %v1459, 0
    %1463 = vmatprep.subr.bf16.mxu0 0
    %1464 = vmatpush1.bf16.msra.mxu0 %v917
    %1465 = vmatprep.subr.bf16.mxu0 0
    %1466 = vmatpush1.bf16.msra.mxu0 %v918
    %1467 = vmatprep.subr.bf16.mxu0 0
    %1468 = vmatpush1.bf16.msra.mxu0 0
    %1469 = vmatprep.subr.bf16.mxu0 0
    %1470 = vmatpush1.bf16.msra.mxu0 0
    %1471 = vmatprep.subr.bf16.mxu0 0
    %1472 = vmatpush1.bf16.msra.mxu0 0
    %1473 = vmatprep.subr.bf16.mxu0 0
    %1474 = vmatpush1.bf16.msra.mxu0 0
    %1475 = vmatprep.subr.bf16.mxu0 0
    %1476 = vmatpush1.bf16.msra.mxu0 0
    %1477 = vmatprep.subr.bf16.mxu0 0
    %1478 = vmatpush1.bf16.msra.mxu0 0
    %1479 = vmatprep.subr.bf16.mxu0 0
    %1480 = vmatpush1.bf16.msra.mxu0 0
    %1481 = vmatprep.subr.bf16.mxu0 0
    %1482 = vmatpush1.bf16.msra.mxu0 0
    %1483 = vmatprep.subr.bf16.mxu0 0
    %1484 = vmatpush1.bf16.msra.mxu0 0
    %1485 = vmatprep.subr.bf16.mxu0 0
    %1486 = vmatpush1.bf16.msra.mxu0 0
    %1487 = vmatprep.subr.bf16.mxu0 0
    %1488 = vmatpush1.bf16.msra.mxu0 0
    %1489 = vmatprep.subr.bf16.mxu0 0
    %1490 = vmatpush1.bf16.msra.mxu0 0
    %1491 = vmatprep.subr.bf16.mxu0 0
    %1492 = vmatpush1.bf16.msra.mxu0 0
    %1493 = vmatprep.subr.bf16.mxu0 0
    %1494 = vmatpush1.bf16.msra.mxu0 0
    %1495 = vmatprep.mubr.bf16.mxu0 0
    %1496 = vmatmul.mubr.bf16.gmra.mrb[0].mxu0 %v1461
    %v1497 = vpop.f32.mrb[0].mxu0
    %v1498 = vadd.f32 0.0, %v1497
    %v1499 = vpop.f32.mrb[0].mxu0
    %v1500 = vpop.f32.mrb[0].mxu0
    %v1501 = vpop.f32.mrb[0].mxu0
    %1502 = vdwg.mxu0
    %v1503 = vadd.f32 %v906, %v1498
    %v1504 = vxor.u32 %v1503, 2147483648
    %v1505 = vmul.f32 %v1504, 1.442695
    %v1506 = vpow.pop %v1505
    %v1507 = vadd.f32 %v1506, 1.0
    %v1508 = vrcp.pop %v1507
    %v1509 = vmul.f32 1.0, %v1508
    %v1510 = vadd.f32 %v1498, %v969
    %1512 = vrot.lane.b32.xlu0 %v1510, 64
    %v1513 = vpop.permute.xlu0 %1512
    %v1515 = vmul.f32 %v1509, %v1513
    %1517 = vrot.lane.b32.xlu0 %v1515, 64
    %v1518 = vpop.permute.xlu0 %1517
    %v1520 = vadd.f32 %v906, %v1518
    %v1521 = vtanh.pop %v1520
    %v1522 = vsub.f32 %v1455, %v1521
    %1524 = vrot.lane.b32.xlu0 %v1522, 96
    %v1525 = vpop.permute.xlu0 %1524
    %v1527 = vmul.f32 %v1509, %v1525
    %1529 = vrot.lane.b32.xlu0 %v1527, 32
    %v1530 = vpop.permute.xlu0 %1529
    %v1532 = vadd.f32 %v1521, %v1530
    %v1533 = vpack.c.bf16 %v1532, %v1532
    %v1534 = vld [vmem:[%s9] sm:$0xf]
    %v1535 = vld [vmem:[%s9 + $0x4] sm:$0xf]
    %v1536 = vld [vmem:[%s9 + $0x8] sm:$0xf]
    %v1537 = vld [vmem:[%s9 + $0xc] sm:$0xf]
    %v1538 = vld [vmem:[%s10] sm:$0x1]
    %v1540 = vlaneseq
    %v1541 = vshrl.u32 %v1540, 7
    %v1542 = vsub.s32 0, %v1541
    %v1543 = vrot.slane %v1538, %v1542
    %1546 = vrot.lane.b32.xlu0 %v1533, 64
    %v1547 = vpop.permute.xlu0 %1546
    %v1552 = vunpack.c.l.b16 %v1534
    %v1553 = vunpack.c.l.b16 %v1535
    %v1554 = vunpack.c.l.b16 %v1536
    %v1555 = vunpack.c.l.b16 %v1537
    %v1556 = vpack.c.b16 %v1553, %v1552
    %v1557 = vpack.c.b16 %v1555, %v1554
    %v1561 = vsel %vm167, %v1547, 0
    %1563 = vmatprep.subr.bf16.mxu0 0
    %1564 = vmatpush1.bf16.msra.mxu0 %v1556
    %1565 = vmatprep.subr.bf16.mxu0 0
    %1566 = vmatpush1.bf16.msra.mxu0 %v1557
    %1567 = vmatprep.subr.bf16.mxu0 0
    %1568 = vmatpush1.bf16.msra.mxu0 0
    %1569 = vmatprep.subr.bf16.mxu0 0
    %1570 = vmatpush1.bf16.msra.mxu0 0
    %1571 = vmatprep.subr.bf16.mxu0 0
    %1572 = vmatpush1.bf16.msra.mxu0 0
    %1573 = vmatprep.subr.bf16.mxu0 0
    %1574 = vmatpush1.bf16.msra.mxu0 0
    %1575 = vmatprep.subr.bf16.mxu0 0
    %1576 = vmatpush1.bf16.msra.mxu0 0
    %1577 = vmatprep.subr.bf16.mxu0 0
    %1578 = vmatpush1.bf16.msra.mxu0 0
    %1579 = vmatprep.subr.bf16.mxu0 0
    %1580 = vmatpush1.bf16.msra.mxu0 0
    %1581 = vmatprep.subr.bf16.mxu0 0
    %1582 = vmatpush1.bf16.msra.mxu0 0
    %1583 = vmatprep.subr.bf16.mxu0 0
    %1584 = vmatpush1.bf16.msra.mxu0 0
    %1585 = vmatprep.subr.bf16.mxu0 0
    %1586 = vmatpush1.bf16.msra.mxu0 0
    %1587 = vmatprep.subr.bf16.mxu0 0
    %1588 = vmatpush1.bf16.msra.mxu0 0
    %1589 = vmatprep.subr.bf16.mxu0 0
    %1590 = vmatpush1.bf16.msra.mxu0 0
    %1591 = vmatprep.subr.bf16.mxu0 0
    %1592 = vmatpush1.bf16.msra.mxu0 0
    %1593 = vmatprep.subr.bf16.mxu0 0
    %1594 = vmatpush1.bf16.msra.mxu0 0
    %1595 = vmatprep.mubr.bf16.mxu0 0
    %1596 = vmatmul.mubr.bf16.gmra.mrb[0].mxu0 %v1561
    %v1597 = vpop.f32.mrb[0].mxu0
    %v1598 = vadd.f32 %v1543, %v1597
    %v1599 = vpop.f32.mrb[0].mxu0
    %v1600 = vpop.f32.mrb[0].mxu0
    %v1601 = vpop.f32.mrb[0].mxu0
    %1602 = vdwg.mxu0
    %vm1603 = vcmask 64512
    %1604 = vst.msk [vmem:[#allocation2] sm:$0xff] %vm1603, %v1598
    // Predicated region
    $region46: #{tpu_custom_call.1} parent=1 // pred_check
      _
    $region47: #{tpu_custom_call.1} parent=1 // pred_check_branch
      %1606 = sbr.rel (0) target = $region49
    $region48: #{tpu_custom_call.1} parent=1 // pred_region
      %s1608 = ssub.s32 128, 128
      %1609 = vsyncadd [#allocation3], %s1608
      %s1611 = sshll.u32 [#allocation2], 4
      %s1612 = int_to_ptr.vmem [resolvable:$true] %s1611
      %1614 = dma.vmem_to_hbm [thread:$0]  %s1612, 128, %s11, [#allocation3]
    $region49: #{tpu_custom_call.1} parent=1 // pred_fallthru
      _
    // Predicated region
    $region50: #{tpu_custom_call.1} parent=1 // pred_check
      _
    $region51: #{tpu_custom_call.1} parent=1 // pred_check_branch
      %1616 = sbr.rel (0) target = $region53
    $region52: #{tpu_custom_call.1} parent=1 // pred_region
      %1617 = dma.done [#allocation3], 128
    $region53: #{tpu_custom_call.1} parent=1 // pred_fallthru
      _
    %1618 = vsyncpa [#allocation3], 1

</llo_original>
